<compile_context>
chip_gen: v6e
topology: v6e:2x2x1
jax: 0.10.0
libtpu: 0.0.40
codegen_flags: <defaults>
</compile_context>

<pallas_src>
import math

import jax
import jax.numpy as jnp
from jax.experimental import pallas as pl
from jax.experimental.pallas import tpu as pltpu

# ------------------------- model dimensions (small) -------------------------
VOCAB = 128
SEQ = 8
HIDDEN = 32
NUM_HEADS = 2
HEAD_DIM = HIDDEN // NUM_HEADS
FFN = 64
NUM_CLASSES = 4
CPAD = 128            # classifier output padded to a full 128-lane vreg
LN_EPS = 1e-5

# rows of the packed (9, 128) bias / layernorm-parameter array
_R_BQKV, _R_BO, _R_BF1, _R_BF2, _R_G1, _R_B1, _R_G2, _R_B2, _R_BC = range(9)


# ------------------------------ Pallas kernel --------------------------------
def _layernorm(x, gamma, beta):
    mu = jnp.mean(x, axis=-1, keepdims=True)
    xc = x - mu
    var = jnp.mean(xc * xc, axis=-1, keepdims=True)
    return xc * jax.lax.rsqrt(var + LN_EPS) * gamma + beta


def _transformer_kernel(
    x_ref,      # (BT*SEQ, HIDDEN)   f32 activations for this batch tile
    bias_ref,   # (BT, 1, SEQ)       f32 additive key-padding bias
    pool_ref,   # (BT, BT*SEQ)       f32 block-diagonal masked-mean pooling matrix
    wqkv_ref,   # (HIDDEN, 3*HIDDEN) bf16 fused Q|K|V projection
    wo_ref,     # (HIDDEN, HIDDEN)   bf16
    w1_ref,     # (HIDDEN, FFN)      bf16
    w2_ref,     # (FFN, HIDDEN)      bf16
    wc_ref,     # (HIDDEN, CPAD)     bf16 classifier, zero-padded past NUM_CLASSES
    vecs_ref,   # (9, 128)           f32 packed biases / LN params
    out_ref,    # (BT, CPAD)         f32 padded logits
):
    bt = pool_ref.shape[0]
    seq = bias_ref.shape[2]
    rows = x_ref.shape[0]

    x = x_ref[...]                                            # (rows, HIDDEN) f32

    # packed small parameters (single DMA'd array, static slices)
    bqkv = vecs_ref[_R_BQKV:_R_BQKV + 1, 0:3 * HIDDEN]        # (1, 96)
    bo   = vecs_ref[_R_BO:_R_BO + 1, 0:HIDDEN]
    bf1  = vecs_ref[_R_BF1:_R_BF1 + 1, 0:FFN]
    bf2  = vecs_ref[_R_BF2:_R_BF2 + 1, 0:HIDDEN]
    g1   = vecs_ref[_R_G1:_R_G1 + 1, 0:HIDDEN]
    be1  = vecs_ref[_R_B1:_R_B1 + 1, 0:HIDDEN]
    g2   = vecs_ref[_R_G2:_R_G2 + 1, 0:HIDDEN]
    be2  = vecs_ref[_R_B2:_R_B2 + 1, 0:HIDDEN]
    bc   = vecs_ref[_R_BC:_R_BC + 1, :]                       # (1, CPAD)

    # ---- fused QKV projection: one bf16 MXU push with N = 96 ----
    qkv = jnp.dot(x.astype(jnp.bfloat16), wqkv_ref[...],
                  preferred_element_type=jnp.float32) + bqkv   # (rows, 96) f32

    # ---- multi-head self-attention, batched over the whole batch tile ----
    bias = bias_ref[...]                                       # (BT, 1, SEQ)
    scale = 1.0 / math.sqrt(HEAD_DIM)

    attn = jnp.zeros((rows, HIDDEN), jnp.float32)
    for h in range(NUM_HEADS):                                 # static unroll (2 heads)
        lo, hi = h * HEAD_DIM, (h + 1) * HEAD_DIM
        qh = qkv[:, lo:hi].reshape(bt, seq, HEAD_DIM)
        kh = qkv[:, HIDDEN + lo:HIDDEN + hi].reshape(bt, seq, HEAD_DIM)
        vh = qkv[:, 2 * HIDDEN + lo:2 * HIDDEN + hi].reshape(bt, seq, HEAD_DIM)

        s = jnp.einsum('bqd,bkd->bqk', qh, kh,
                       preferred_element_type=jnp.float32) * scale + bias
        m = jnp.max(s, axis=-1, keepdims=True)
        p = jnp.exp(s - m)
        p = p / jnp.sum(p, axis=-1, keepdims=True)
        ctx = jnp.einsum('bqk,bkd->bqd', p, vh,
                         preferred_element_type=jnp.float32)   # (BT, SEQ, HEAD_DIM)
        # per-head partial output projection (== concat(ctx_heads) @ wo; avoids a
        # minor-dim concatenate at HEAD_DIM=16)
        attn = attn + jnp.dot(ctx.reshape(rows, HEAD_DIM).astype(jnp.bfloat16),
                              wo_ref[lo:hi, :], preferred_element_type=jnp.float32)
    attn = attn + bo

    h1 = _layernorm(x + attn, g1, be1)

    # ---- feed-forward (ReLU, as in nn.TransformerEncoderLayer default) ----
    ff = jnp.dot(h1.astype(jnp.bfloat16), w1_ref[...],
                 preferred_element_type=jnp.float32) + bf1
    ff = jnp.maximum(ff, 0.0)
    ff = jnp.dot(ff.astype(jnp.bfloat16), w2_ref[...],
                 preferred_element_type=jnp.float32) + bf2

    h2 = _layernorm(h1 + ff, g2, be2)

    # ---- masked mean pool (one matmul) + classifier over all rows at once ----
    pooled = jnp.dot(pool_ref[...], h2,
                     preferred_element_type=jnp.float32)       # (BT, HIDDEN)
    logits = jnp.dot(pooled.astype(jnp.bfloat16), wc_ref[...],
                     preferred_element_type=jnp.float32) + bc  # (BT, CPAD) lane-dense
    out_ref[...] = logits


# -------------------------------- wrappers -----------------------------------
def _pick_batch_tile(batch):
    """Largest lane-aligned batch tile (cand*SEQ multiple of 128) that divides B,
    else a single full-batch tile."""
    for cand in (128, 64, 32, 16):
        if cand < batch and batch % cand == 0:
            return cand
    return batch


def transformer_forward(input_ids, attention_mask, params):
    B, S = input_ids.shape
    assert S == SEQ

    # glue: embedding gather + positional add (XLA), batch folded into matmul M.
    x = (params["tok_emb"][input_ids] + params["pos_emb"][None, :, :]).astype(jnp.float32)
    x = x.reshape(B * S, HIDDEN)

    mask = attention_mask.astype(jnp.float32)                        # (B, S)
    attn_bias = ((mask - 1.0) * 1e9).reshape(B, 1, S)                # additive key mask
    denom = jnp.maximum(jnp.sum(mask, axis=-1, keepdims=True), 1.0)
    pool_w = (mask / denom).reshape(B * S)                           # normalized weights
    batch_ids = jnp.repeat(jnp.arange(B), S)                         # (B*S,)
    pool_mat = (jnp.arange(B)[:, None] == batch_ids[None, :]).astype(jnp.float32) \
        * pool_w[None, :]                                            # (B, B*S) block-diag

    bt = _pick_batch_tile(B)
    grid = (B // bt,)

    weights = (params["wqkv"], params["wo"], params["w1"], params["w2"],
               params["wc_pad"], params["vecs"])

    def full_spec(shape):
        nd = len(shape)
        return pl.BlockSpec(shape, lambda i, _n=nd: (0,) * _n)

    in_specs = [
        pl.BlockSpec((bt * S, HIDDEN), lambda i: (i, 0)),
        pl.BlockSpec((bt, 1, S), lambda i: (i, 0, 0)),
        pl.BlockSpec((bt, bt * S), lambda i: (i, i)),   # diagonal block of pool matrix
    ] + [full_spec(w.shape) for w in weights]

    out = pl.pallas_call(
        _transformer_kernel,
        out_shape=jax.ShapeDtypeStruct((B, CPAD), jnp.float32),
        grid_spec=pltpu.PrefetchScalarGridSpec(
            num_scalar_prefetch=0,
            grid=grid,
            in_specs=in_specs,
            out_specs=pl.BlockSpec((bt, CPAD), lambda i: (i, 0)),
        ),
        compiler_params=pltpu.CompilerParams(
            dimension_semantics=("parallel",)),          # batch tiles shard across TCs (v7x)
    )(x, attn_bias, pool_mat, *weights)
    return out[:, :NUM_CLASSES]


def compute_loss(logits, labels):
    """CrossEntropyLoss(mean).  Plain XLA: per perf review, a separate
    pallas_call over a (B, C) = (2, 4) array is ~100% launch / DMA overhead."""
    logits = logits.astype(jnp.float32)
    m = jnp.max(logits, axis=-1, keepdims=True)
    lse = m + jnp.log(jnp.sum(jnp.exp(logits - m), axis=-1, keepdims=True))
    tgt = jnp.take_along_axis(logits, labels[:, None], axis=-1)
    return jnp.mean(lse - tgt)


# ----------------------------- parameter init --------------------------------
def init_params(key):
    ks = jax.random.split(key, 8)

    def dense(k, shape):
        return jax.random.normal(k, shape, jnp.float32) / math.sqrt(shape[0])

    # fused QKV projection ( == concat(wq | wk | wv) along the output axis)
    wqkv = dense(ks[2], (HIDDEN, 3 * HIDDEN))
    wo = dense(ks[3], (HIDDEN, HIDDEN))
    w1 = dense(ks[4], (HIDDEN, FFN))
    w2 = dense(ks[5], (FFN, HIDDEN))
    wc = dense(ks[6], (HIDDEN, NUM_CLASSES))
    wc_pad = jnp.zeros((HIDDEN, CPAD), jnp.float32).at[:, :NUM_CLASSES].set(wc)

    # packed biases / layernorm params: one (9, 128) f32 array, one DMA.
    vecs = jnp.zeros((9, 128), jnp.float32)
    vecs = vecs.at[_R_G1, :HIDDEN].set(1.0)   # ln1 gamma
    vecs = vecs.at[_R_G2, :HIDDEN].set(1.0)   # ln2 gamma
    # all biases / betas initialize to zero (rows already zero)

    return {
        "tok_emb": jax.random.normal(ks[0], (VOCAB, HIDDEN), jnp.float32) * 0.02,
        "pos_emb": jax.random.normal(ks[1], (SEQ, HIDDEN), jnp.float32) * 0.02,
        # matmul weights stored in bf16 (halved DMA bytes, native MXU path;
        # accumulation stays f32 via preferred_element_type)
        "wqkv": wqkv.astype(jnp.bfloat16),
        "wo": wo.astype(jnp.bfloat16),
        "w1": w1.astype(jnp.bfloat16),
        "w2": w2.astype(jnp.bfloat16),
        "wc_pad": wc_pad.astype(jnp.bfloat16),
        "vecs": vecs,
    }


# ---------------------------------- main --------------------------------------
if __name__ == "__main__":
    key = jax.random.PRNGKey(0)
    pkey, dkey, lkey = jax.random.split(key, 3)

    params = init_params(pkey)

    B = 2
    input_ids = jax.random.randint(dkey, (B, SEQ), 0, VOCAB, dtype=jnp.int32)
    attention_mask = jnp.array([[1] * SEQ, [1] * 6 + [0] * 2], dtype=jnp.int32)
    labels = jax.random.randint(lkey, (B,), 0, NUM_CLASSES, dtype=jnp.int32)

    logits = transformer_forward(input_ids, attention_mask, params)   # (B, NUM_CLASSES)
    loss = compute_loss(logits, labels)                               # scalar

    jax.block_until_ready((logits, loss))
    print("KERNEL_OK")
</pallas_src>

<mosaic_0001>
module attributes {stable_mosaic.version = 11 : i64} {
  func.func @_transformer_kernel(%arg0: i32, %arg1: memref<16x32xf32, #tpu.memory_space<vmem>>, %arg2: memref<2x1x8xf32, #tpu.memory_space<vmem>>, %arg3: memref<2x16xf32, #tpu.memory_space<vmem>>, %arg4: memref<32x96xbf16, #tpu.memory_space<vmem>>, %arg5: memref<32x32xbf16, #tpu.memory_space<vmem>>, %arg6: memref<32x64xbf16, #tpu.memory_space<vmem>>, %arg7: memref<64x32xbf16, #tpu.memory_space<vmem>>, %arg8: memref<32x128xbf16, #tpu.memory_space<vmem>>, %arg9: memref<9x128xf32, #tpu.memory_space<vmem>>, %arg10: memref<2x128xf32, #tpu.memory_space<vmem>>) attributes {dimension_semantics = [#tpu.dimension_semantics<parallel>], iteration_bounds = array<i64: 1>, scalar_prefetch = 0 : i64, scratch_operands = 0 : i64, tpu.core_type = #tpu.core_type<tc>, window_params = [{transform_indices = @transform_0, window_bounds = array<i64: 16, 32>}, {transform_indices = @transform_1, window_bounds = array<i64: 2, 1, 8>}, {transform_indices = @transform_2, window_bounds = array<i64: 2, 16>}, {pipeline_mode = #tpu.pipeline_mode<synchronous>, transform_indices = @transform_3, window_bounds = array<i64: 32, 96>}, {pipeline_mode = #tpu.pipeline_mode<synchronous>, transform_indices = @transform_4, window_bounds = array<i64: 32, 32>}, {pipeline_mode = #tpu.pipeline_mode<synchronous>, transform_indices = @transform_5, window_bounds = array<i64: 32, 64>}, {pipeline_mode = #tpu.pipeline_mode<synchronous>, transform_indices = @transform_6, window_bounds = array<i64: 64, 32>}, {pipeline_mode = #tpu.pipeline_mode<synchronous>, transform_indices = @transform_7, window_bounds = array<i64: 32, 128>}, {pipeline_mode = #tpu.pipeline_mode<synchronous>, transform_indices = @transform_8, window_bounds = array<i64: 9, 128>}, {transform_indices = @transform_9, window_bounds = array<i64: 2, 128>}]} {
    %c0 = arith.constant 0 : index
    %c0_0 = arith.constant 0 : index
    %0 = vector.load %arg1[%c0, %c0_0] : memref<16x32xf32, #tpu.memory_space<vmem>>, vector<16x32xf32>
    %c0_1 = arith.constant 0 : index
    %c0_2 = arith.constant 0 : index
    %1 = vector.load %arg9[%c0_1, %c0_2] : memref<9x128xf32, #tpu.memory_space<vmem>>, vector<1x96xf32>
    %c1 = arith.constant 1 : index
    %c0_3 = arith.constant 0 : index
    %2 = vector.load %arg9[%c1, %c0_3] : memref<9x128xf32, #tpu.memory_space<vmem>>, vector<1x32xf32>
    %c2 = arith.constant 2 : index
    %c0_4 = arith.constant 0 : index
    %3 = vector.load %arg9[%c2, %c0_4] : memref<9x128xf32, #tpu.memory_space<vmem>>, vector<1x64xf32>
    %c3 = arith.constant 3 : index
    %c0_5 = arith.constant 0 : index
    %4 = vector.load %arg9[%c3, %c0_5] : memref<9x128xf32, #tpu.memory_space<vmem>>, vector<1x32xf32>
    %c4 = arith.constant 4 : index
    %c0_6 = arith.constant 0 : index
    %5 = vector.load %arg9[%c4, %c0_6] : memref<9x128xf32, #tpu.memory_space<vmem>>, vector<1x32xf32>
    %c5 = arith.constant 5 : index
    %c0_7 = arith.constant 0 : index
    %6 = vector.load %arg9[%c5, %c0_7] : memref<9x128xf32, #tpu.memory_space<vmem>>, vector<1x32xf32>
    %c6 = arith.constant 6 : index
    %c0_8 = arith.constant 0 : index
    %7 = vector.load %arg9[%c6, %c0_8] : memref<9x128xf32, #tpu.memory_space<vmem>>, vector<1x32xf32>
    %c7 = arith.constant 7 : index
    %c0_9 = arith.constant 0 : index
    %8 = vector.load %arg9[%c7, %c0_9] : memref<9x128xf32, #tpu.memory_space<vmem>>, vector<1x32xf32>
    %c8 = arith.constant 8 : index
    %c0_10 = arith.constant 0 : index
    %9 = vector.load %arg9[%c8, %c0_10] : memref<9x128xf32, #tpu.memory_space<vmem>>, vector<1x128xf32>
    %10 = arith.truncf %0 : vector<16x32xf32> to vector<16x32xbf16>
    %c0_11 = arith.constant 0 : index
    %c0_12 = arith.constant 0 : index
    %11 = vector.load %arg4[%c0_11, %c0_12] : memref<32x96xbf16, #tpu.memory_space<vmem>>, vector<32x96xbf16>
    %cst = arith.constant dense<0.000000e+00> : vector<16x96xf32>
    %12 = tpu.matmul %10, %11, %cst {dimension_numbers = #tpu.dot_dimension_numbers<[1], [0], [0], [1], [0, 0, 1, 1], [], []>} : vector<16x32xbf16>, vector<32x96xbf16>, vector<16x96xf32> -> vector<16x96xf32>
    %13 = vector.broadcast %1 : vector<1x96xf32> to vector<16x96xf32>
    %14 = arith.addf %12, %13 : vector<16x96xf32>
    %c0_13 = arith.constant 0 : index
    %c0_14 = arith.constant 0 : index
    %c0_15 = arith.constant 0 : index
    %15 = vector.load %arg2[%c0_13, %c0_14, %c0_15] : memref<2x1x8xf32, #tpu.memory_space<vmem>>, vector<2x1x8xf32>
    %cst_16 = arith.constant 0.000000e+00 : f32
    %16 = vector.broadcast %cst_16 : f32 to vector<16x32xf32>
    %17 = vector.extract_strided_slice %14 {offsets = [0, 0], sizes = [16, 16], strides = [1, 1]} : vector<16x96xf32> to vector<16x16xf32>
    %18 = vector.shape_cast %17 : vector<16x16xf32> to vector<2x8x16xf32>
    %19 = vector.extract_strided_slice %14 {offsets = [0, 32], sizes = [16, 16], strides = [1, 1]} : vector<16x96xf32> to vector<16x16xf32>
    %20 = vector.shape_cast %19 : vector<16x16xf32> to vector<2x8x16xf32>
    %21 = vector.extract_strided_slice %14 {offsets = [0, 64], sizes = [16, 16], strides = [1, 1]} : vector<16x96xf32> to vector<16x16xf32>
    %22 = vector.shape_cast %21 : vector<16x16xf32> to vector<2x8x16xf32>
    "tpu.trace_start"() <{level = 10 : i32, message = "bqd,bkd->bqk"}> : () -> ()
    %cst_17 = arith.constant dense<0.000000e+00> : vector<2x8x8xf32>
    %23 = tpu.matmul %18, %20, %cst_17 {dimension_numbers = #tpu.dot_dimension_numbers<[2], [2], [1], [1], [0, 0, 0, 1, 1, 1], [0], [0]>} : vector<2x8x16xf32>, vector<2x8x16xf32>, vector<2x8x8xf32> -> vector<2x8x8xf32>
    "tpu.trace_stop"() : () -> ()
    %cst_18 = arith.constant 2.500000e-01 : f32
    %24 = vector.broadcast %cst_18 : f32 to vector<2x8x8xf32>
    %25 = arith.mulf %23, %24 : vector<2x8x8xf32>
    %26 = vector.broadcast %15 : vector<2x1x8xf32> to vector<2x8x8xf32>
    %27 = arith.addf %25, %26 : vector<2x8x8xf32>
    %cst_19 = arith.constant dense<0xFF800000> : vector<2x8xf32>
    %28 = vector.multi_reduction <maximumf>, %27, %cst_19 [2] : vector<2x8x8xf32> to vector<2x8xf32>
    %29 = vector.shape_cast %28 : vector<2x8xf32> to vector<2x8x1xf32>
    %30 = vector.broadcast %29 : vector<2x8x1xf32> to vector<2x8x8xf32>
    %31 = arith.subf %27, %30 : vector<2x8x8xf32>
    %32 = math.exp %31 : vector<2x8x8xf32>
    %cst_20 = arith.constant dense<0.000000e+00> : vector<2x8xf32>
    %33 = vector.multi_reduction <add>, %32, %cst_20 [2] : vector<2x8x8xf32> to vector<2x8xf32>
    %34 = vector.shape_cast %33 : vector<2x8xf32> to vector<2x8x1xf32>
    %35 = vector.broadcast %34 : vector<2x8x1xf32> to vector<2x8x8xf32>
    %36 = arith.divf %32, %35 : vector<2x8x8xf32>
    "tpu.trace_start"() <{level = 10 : i32, message = "bqk,bkd->bqd"}> : () -> ()
    %cst_21 = arith.constant dense<0.000000e+00> : vector<2x8x16xf32>
    %37 = tpu.matmul %36, %22, %cst_21 {dimension_numbers = #tpu.dot_dimension_numbers<[2], [1], [1], [2], [0, 0, 0, 1, 1, 2], [0], [0]>} : vector<2x8x8xf32>, vector<2x8x16xf32>, vector<2x8x16xf32> -> vector<2x8x16xf32>
    "tpu.trace_stop"() : () -> ()
    %38 = vector.shape_cast %37 : vector<2x8x16xf32> to vector<16x16xf32>
    %39 = arith.truncf %38 : vector<16x16xf32> to vector<16x16xbf16>
    %c0_22 = arith.constant 0 : index
    %c0_23 = arith.constant 0 : index
    %40 = vector.load %arg5[%c0_22, %c0_23] : memref<32x32xbf16, #tpu.memory_space<vmem>>, vector<16x32xbf16>
    %cst_24 = arith.constant dense<0.000000e+00> : vector<16x32xf32>
    %41 = tpu.matmul %39, %40, %cst_24 {dimension_numbers = #tpu.dot_dimension_numbers<[1], [0], [0], [1], [0, 0, 1, 1], [], []>} : vector<16x16xbf16>, vector<16x32xbf16>, vector<16x32xf32> -> vector<16x32xf32>
    %42 = arith.addf %16, %41 : vector<16x32xf32>
    %43 = vector.extract_strided_slice %14 {offsets = [0, 16], sizes = [16, 16], strides = [1, 1]} : vector<16x96xf32> to vector<16x16xf32>
    %44 = vector.shape_cast %43 : vector<16x16xf32> to vector<2x8x16xf32>
    %45 = vector.extract_strided_slice %14 {offsets = [0, 48], sizes = [16, 16], strides = [1, 1]} : vector<16x96xf32> to vector<16x16xf32>
    %46 = vector.shape_cast %45 : vector<16x16xf32> to vector<2x8x16xf32>
    %47 = vector.extract_strided_slice %14 {offsets = [0, 80], sizes = [16, 16], strides = [1, 1]} : vector<16x96xf32> to vector<16x16xf32>
    %48 = vector.shape_cast %47 : vector<16x16xf32> to vector<2x8x16xf32>
    "tpu.trace_start"() <{level = 10 : i32, message = "bqd,bkd->bqk"}> : () -> ()
    %cst_25 = arith.constant dense<0.000000e+00> : vector<2x8x8xf32>
    %49 = tpu.matmul %44, %46, %cst_25 {dimension_numbers = #tpu.dot_dimension_numbers<[2], [2], [1], [1], [0, 0, 0, 1, 1, 1], [0], [0]>} : vector<2x8x16xf32>, vector<2x8x16xf32>, vector<2x8x8xf32> -> vector<2x8x8xf32>
    "tpu.trace_stop"() : () -> ()
    %cst_26 = arith.constant 2.500000e-01 : f32
    %50 = vector.broadcast %cst_26 : f32 to vector<2x8x8xf32>
    %51 = arith.mulf %49, %50 : vector<2x8x8xf32>
    %52 = vector.broadcast %15 : vector<2x1x8xf32> to vector<2x8x8xf32>
    %53 = arith.addf %51, %52 : vector<2x8x8xf32>
    %cst_27 = arith.constant dense<0xFF800000> : vector<2x8xf32>
    %54 = vector.multi_reduction <maximumf>, %53, %cst_27 [2] : vector<2x8x8xf32> to vector<2x8xf32>
    %55 = vector.shape_cast %54 : vector<2x8xf32> to vector<2x8x1xf32>
    %56 = vector.broadcast %55 : vector<2x8x1xf32> to vector<2x8x8xf32>
    %57 = arith.subf %53, %56 : vector<2x8x8xf32>
    %58 = math.exp %57 : vector<2x8x8xf32>
    %cst_28 = arith.constant dense<0.000000e+00> : vector<2x8xf32>
    %59 = vector.multi_reduction <add>, %58, %cst_28 [2] : vector<2x8x8xf32> to vector<2x8xf32>
    %60 = vector.shape_cast %59 : vector<2x8xf32> to vector<2x8x1xf32>
    %61 = vector.broadcast %60 : vector<2x8x1xf32> to vector<2x8x8xf32>
    %62 = arith.divf %58, %61 : vector<2x8x8xf32>
    "tpu.trace_start"() <{level = 10 : i32, message = "bqk,bkd->bqd"}> : () -> ()
    %cst_29 = arith.constant dense<0.000000e+00> : vector<2x8x16xf32>
    %63 = tpu.matmul %62, %48, %cst_29 {dimension_numbers = #tpu.dot_dimension_numbers<[2], [1], [1], [2], [0, 0, 0, 1, 1, 2], [0], [0]>} : vector<2x8x8xf32>, vector<2x8x16xf32>, vector<2x8x16xf32> -> vector<2x8x16xf32>
    "tpu.trace_stop"() : () -> ()
    %64 = vector.shape_cast %63 : vector<2x8x16xf32> to vector<16x16xf32>
    %65 = arith.truncf %64 : vector<16x16xf32> to vector<16x16xbf16>
    %c16 = arith.constant 16 : index
    %c0_30 = arith.constant 0 : index
    %66 = vector.load %arg5[%c16, %c0_30] : memref<32x32xbf16, #tpu.memory_space<vmem>>, vector<16x32xbf16>
    %cst_31 = arith.constant dense<0.000000e+00> : vector<16x32xf32>
    %67 = tpu.matmul %65, %66, %cst_31 {dimension_numbers = #tpu.dot_dimension_numbers<[1], [0], [0], [1], [0, 0, 1, 1], [], []>} : vector<16x16xbf16>, vector<16x32xbf16>, vector<16x32xf32> -> vector<16x32xf32>
    %68 = arith.addf %42, %67 : vector<16x32xf32>
    %69 = vector.broadcast %2 : vector<1x32xf32> to vector<16x32xf32>
    %70 = arith.addf %68, %69 : vector<16x32xf32>
    %71 = arith.addf %0, %70 : vector<16x32xf32>
    %cst_32 = arith.constant dense<0.000000e+00> : vector<16xf32>
    %72 = vector.multi_reduction <add>, %71, %cst_32 [1] : vector<16x32xf32> to vector<16xf32>
    %73 = vector.shape_cast %72 : vector<16xf32> to vector<16x1xf32>
    %cst_33 = arith.constant 3.200000e+01 : f32
    %74 = vector.broadcast %cst_33 : f32 to vector<16x1xf32>
    %75 = arith.divf %73, %74 : vector<16x1xf32>
    %76 = vector.broadcast %75 : vector<16x1xf32> to vector<16x32xf32>
    %77 = arith.subf %71, %76 : vector<16x32xf32>
    %78 = arith.mulf %77, %77 : vector<16x32xf32>
    %cst_34 = arith.constant dense<0.000000e+00> : vector<16xf32>
    %79 = vector.multi_reduction <add>, %78, %cst_34 [1] : vector<16x32xf32> to vector<16xf32>
    %80 = vector.shape_cast %79 : vector<16xf32> to vector<16x1xf32>
    %cst_35 = arith.constant 3.200000e+01 : f32
    %81 = vector.broadcast %cst_35 : f32 to vector<16x1xf32>
    %82 = arith.divf %80, %81 : vector<16x1xf32>
    %cst_36 = arith.constant 9.99999974E-6 : f32
    %83 = vector.broadcast %cst_36 : f32 to vector<16x1xf32>
    %84 = arith.addf %82, %83 : vector<16x1xf32>
    %85 = math.rsqrt %84 : vector<16x1xf32>
    %86 = vector.broadcast %85 : vector<16x1xf32> to vector<16x32xf32>
    %87 = arith.mulf %77, %86 : vector<16x32xf32>
    %88 = vector.broadcast %5 : vector<1x32xf32> to vector<16x32xf32>
    %89 = arith.mulf %87, %88 : vector<16x32xf32>
    %90 = vector.broadcast %6 : vector<1x32xf32> to vector<16x32xf32>
    %91 = arith.addf %89, %90 : vector<16x32xf32>
    %92 = arith.truncf %91 : vector<16x32xf32> to vector<16x32xbf16>
    %c0_37 = arith.constant 0 : index
    %c0_38 = arith.constant 0 : index
    %93 = vector.load %arg6[%c0_37, %c0_38] : memref<32x64xbf16, #tpu.memory_space<vmem>>, vector<32x64xbf16>
    %cst_39 = arith.constant dense<0.000000e+00> : vector<16x64xf32>
    %94 = tpu.matmul %92, %93, %cst_39 {dimension_numbers = #tpu.dot_dimension_numbers<[1], [0], [0], [1], [0, 0, 1, 1], [], []>} : vector<16x32xbf16>, vector<32x64xbf16>, vector<16x64xf32> -> vector<16x64xf32>
    %95 = vector.broadcast %3 : vector<1x64xf32> to vector<16x64xf32>
    %96 = arith.addf %94, %95 : vector<16x64xf32>
    %cst_40 = arith.constant 0.000000e+00 : f32
    %97 = vector.broadcast %cst_40 : f32 to vector<16x64xf32>
    %98 = arith.maximumf %96, %97 : vector<16x64xf32>
    %99 = arith.truncf %98 : vector<16x64xf32> to vector<16x64xbf16>
    %c0_41 = arith.constant 0 : index
    %c0_42 = arith.constant 0 : index
    %100 = vector.load %arg7[%c0_41, %c0_42] : memref<64x32xbf16, #tpu.memory_space<vmem>>, vector<64x32xbf16>
    %cst_43 = arith.constant dense<0.000000e+00> : vector<16x32xf32>
    %101 = tpu.matmul %99, %100, %cst_43 {dimension_numbers = #tpu.dot_dimension_numbers<[1], [0], [0], [1], [0, 0, 1, 1], [], []>} : vector<16x64xbf16>, vector<64x32xbf16>, vector<16x32xf32> -> vector<16x32xf32>
    %102 = vector.broadcast %4 : vector<1x32xf32> to vector<16x32xf32>
    %103 = arith.addf %101, %102 : vector<16x32xf32>
    %104 = arith.addf %91, %103 : vector<16x32xf32>
    %cst_44 = arith.constant dense<0.000000e+00> : vector<16xf32>
    %105 = vector.multi_reduction <add>, %104, %cst_44 [1] : vector<16x32xf32> to vector<16xf32>
    %106 = vector.shape_cast %105 : vector<16xf32> to vector<16x1xf32>
    %cst_45 = arith.constant 3.200000e+01 : f32
    %107 = vector.broadcast %cst_45 : f32 to vector<16x1xf32>
    %108 = arith.divf %106, %107 : vector<16x1xf32>
    %109 = vector.broadcast %108 : vector<16x1xf32> to vector<16x32xf32>
    %110 = arith.subf %104, %109 : vector<16x32xf32>
    %111 = arith.mulf %110, %110 : vector<16x32xf32>
    %cst_46 = arith.constant dense<0.000000e+00> : vector<16xf32>
    %112 = vector.multi_reduction <add>, %111, %cst_46 [1] : vector<16x32xf32> to vector<16xf32>
    %113 = vector.shape_cast %112 : vector<16xf32> to vector<16x1xf32>
    %cst_47 = arith.constant 3.200000e+01 : f32
    %114 = vector.broadcast %cst_47 : f32 to vector<16x1xf32>
    %115 = arith.divf %113, %114 : vector<16x1xf32>
    %cst_48 = arith.constant 9.99999974E-6 : f32
    %116 = vector.broadcast %cst_48 : f32 to vector<16x1xf32>
    %117 = arith.addf %115, %116 : vector<16x1xf32>
    %118 = math.rsqrt %117 : vector<16x1xf32>
    %119 = vector.broadcast %118 : vector<16x1xf32> to vector<16x32xf32>
    %120 = arith.mulf %110, %119 : vector<16x32xf32>
    %121 = vector.broadcast %7 : vector<1x32xf32> to vector<16x32xf32>
    %122 = arith.mulf %120, %121 : vector<16x32xf32>
    %123 = vector.broadcast %8 : vector<1x32xf32> to vector<16x32xf32>
    %124 = arith.addf %122, %123 : vector<16x32xf32>
    %c0_49 = arith.constant 0 : index
    %c0_50 = arith.constant 0 : index
    %125 = vector.load %arg3[%c0_49, %c0_50] : memref<2x16xf32, #tpu.memory_space<vmem>>, vector<2x16xf32>
    %cst_51 = arith.constant dense<0.000000e+00> : vector<2x32xf32>
    %126 = tpu.matmul %125, %124, %cst_51 {dimension_numbers = #tpu.dot_dimension_numbers<[1], [0], [0], [1], [0, 0, 1, 1], [], []>} : vector<2x16xf32>, vector<16x32xf32>, vector<2x32xf32> -> vector<2x32xf32>
    %127 = arith.truncf %126 : vector<2x32xf32> to vector<2x32xbf16>
    %c0_52 = arith.constant 0 : index
    %c0_53 = arith.constant 0 : index
    %128 = vector.load %arg8[%c0_52, %c0_53] : memref<32x128xbf16, #tpu.memory_space<vmem>>, vector<32x128xbf16>
    %cst_54 = arith.constant dense<0.000000e+00> : vector<2x128xf32>
    %129 = tpu.matmul %127, %128, %cst_54 {dimension_numbers = #tpu.dot_dimension_numbers<[1], [0], [0], [1], [0, 0, 1, 1], [], []>} : vector<2x32xbf16>, vector<32x128xbf16>, vector<2x128xf32> -> vector<2x128xf32>
    %130 = vector.broadcast %9 : vector<1x128xf32> to vector<2x128xf32>
    %131 = arith.addf %129, %130 : vector<2x128xf32>
    %c0_55 = arith.constant 0 : index
    %c0_56 = arith.constant 0 : index
    %132 = vector.load %arg10[%c0_55, %c0_56] : memref<2x128xf32, #tpu.memory_space<vmem>>, vector<2x128xf32>
    tpu.vector_store %arg10[%c0_55, %c0_56], %131 {strides = array<i32>} : memref<2x128xf32, #tpu.memory_space<vmem>>, vector<2x128xf32>,
    return
  }
  func.func @transform_0(%arg0: i32) -> (i32, i32) {
    %c0_i32 = arith.constant 0 : i32
    %c0_i32_0 = arith.constant 0 : i32
    return %arg0, %c0_i32 : i32, i32
  }
  func.func @transform_1(%arg0: i32) -> (i32, i32, i32) {
    %c0_i32 = arith.constant 0 : i32
    %c0_i32_0 = arith.constant 0 : i32
    %c0_i32_1 = arith.constant 0 : i32
    return %arg0, %c0_i32, %c0_i32_0 : i32, i32, i32
  }
  func.func @transform_2(%arg0: i32) -> (i32, i32) {
    %c0_i32 = arith.constant 0 : i32
    return %arg0, %arg0 : i32, i32
  }
  func.func @transform_3(%arg0: i32) -> (i32, i32) {
    %c0_i32 = arith.constant 0 : i32
    %c0_i32_0 = arith.constant 0 : i32
    %c0_i32_1 = arith.constant 0 : i32
    return %c0_i32, %c0_i32_0 : i32, i32
  }
  func.func @transform_4(%arg0: i32) -> (i32, i32) {
    %c0_i32 = arith.constant 0 : i32
    %c0_i32_0 = arith.constant 0 : i32
    %c0_i32_1 = arith.constant 0 : i32
    return %c0_i32, %c0_i32_0 : i32, i32
  }
  func.func @transform_5(%arg0: i32) -> (i32, i32) {
    %c0_i32 = arith.constant 0 : i32
    %c0_i32_0 = arith.constant 0 : i32
    %c0_i32_1 = arith.constant 0 : i32
    return %c0_i32, %c0_i32_0 : i32, i32
  }
  func.func @transform_6(%arg0: i32) -> (i32, i32) {
    %c0_i32 = arith.constant 0 : i32
    %c0_i32_0 = arith.constant 0 : i32
    %c0_i32_1 = arith.constant 0 : i32
    return %c0_i32, %c0_i32_0 : i32, i32
  }
  func.func @transform_7(%arg0: i32) -> (i32, i32) {
    %c0_i32 = arith.constant 0 : i32
    %c0_i32_0 = arith.constant 0 : i32
    %c0_i32_1 = arith.constant 0 : i32
    return %c0_i32, %c0_i32_0 : i32, i32
  }
  func.func @transform_8(%arg0: i32) -> (i32, i32) {
    %c0_i32 = arith.constant 0 : i32
    %c0_i32_0 = arith.constant 0 : i32
    %c0_i32_1 = arith.constant 0 : i32
    return %c0_i32, %c0_i32_0 : i32, i32
  }
  func.func @transform_9(%arg0: i32) -> (i32, i32) {
    %c0_i32 = arith.constant 0 : i32
    %c0_i32_0 = arith.constant 0 : i32
    return %arg0, %c0_i32 : i32, i32
  }
}

</mosaic_0001>

<llo_original>
// kernel: tpu_custom_call.1
$region0: #{tpu_custom_call.1}
  #allocation0 [shape = 'u32[]', space=smem, size = 0x4, offset = 0x4, fixed_abs, tag = 'smem constant byte address 0x4 - core index']
  #allocation1 [shape = 'u32[144,128]{1,0:T(1,128)}', space=vmem, size = 0x12000, scoped, tag = 'internal scratch']
  %s0 = inlined_call_operand.vmem [shape: f32[16,32], index: 0, kind: input, shape index: {}]
  %s1 = inlined_call_operand.hbm [shape: f32[2,1,8], index: 1, kind: input, shape index: {}]
  %s2 = inlined_call_operand.vmem [shape: f32[2,16], index: 2, kind: input, shape index: {}]
  %s3 = inlined_call_operand.vmem [shape: bf16[32,96], index: 3, kind: input, shape index: {}]
  %s4 = inlined_call_operand.vmem [shape: bf16[32,32], index: 4, kind: input, shape index: {}]
  %s5 = inlined_call_operand.hbm [shape: bf16[32,64], index: 5, kind: input, shape index: {}]
  %s6 = inlined_call_operand.vmem [shape: bf16[64,32], index: 6, kind: input, shape index: {}]
  %s7 = inlined_call_operand.hbm [shape: bf16[32,128], index: 7, kind: input, shape index: {}]
  %s8 = inlined_call_operand.hbm [shape: f32[9,128], index: 8, kind: input, shape index: {}]
  %s9 = inlined_call_operand.hbm [shape: f32[2,128], index: 9, kind: output, shape index: {}]
  %s10 = sld [smem:[#allocation0]]
  $region62: #{tpu_custom_call.1} parent=0
    _
  %s12 = ssub.s32 1, %s10
  %s13 = scalar_select 0, %s12, %s10
  $region1: #{tpu_custom_call.1} parent=0
    #allocation2 [shape = 'u8[1024]{0}', space=vmem, size = 0x400, scoped, tag = 'input window, operand 1, single buffered']
    #allocation3 [shape = 's32[1]{0}', space=sflag, size = 0x4, scoped, tag = 'scoped memory for tpu_custom_call.1']
    #allocation4 [shape = 's32[1]{0}', space=sflag, size = 0x4, scoped, tag = 'scoped memory for tpu_custom_call.1']
    #allocation5 [shape = 'u8[8192]{0}', space=vmem, size = 0x2000, scoped, tag = 'input window, operand 5, single buffered']
    #allocation6 [shape = 's32[1]{0}', space=sflag, size = 0x4, scoped, tag = 'scoped memory for tpu_custom_call.1']
    #allocation7 [shape = 'u8[8192]{0}', space=vmem, size = 0x2000, scoped, tag = 'input window, operand 7, single buffered']
    #allocation8 [shape = 'u8[8192]{0}', space=vmem, size = 0x2000, scoped, tag = 'input window, operand 8, single buffered']
    #allocation9 [shape = 's32[1]{0}', space=sflag, size = 0x4, scoped, tag = 'scoped memory for tpu_custom_call.1']
    #allocation10 [shape = 'u8[1024]{0}', space=vmem, size = 0x400, scoped, tag = 'output window, operand 0, single buffered']
    %14 = vsyncpa [#allocation3], 0
    %15 = vsyncpa [#allocation6], 0
    %16 = vsyncpa [#allocation9], 0
    %17 = vsyncpa [#allocation4], 0
    // Predicated region
    $region2: #{tpu_custom_call.1} parent=1 // pred_check
      _
    $region3: #{tpu_custom_call.1} parent=1 // pred_check_branch
      %19 = sbr.rel (0) target = $region5
    $region4: #{tpu_custom_call.1} parent=1 // pred_region
      _
    $region5: #{tpu_custom_call.1} parent=1 // pred_fallthru
      _
    // Predicated region
    $region6: #{tpu_custom_call.1} parent=1 // pred_check
      _
    $region7: #{tpu_custom_call.1} parent=1 // pred_check_branch
      %21 = sbr.rel (0) target = $region9
    $region8: #{tpu_custom_call.1} parent=1 // pred_region
      %s23 = ssub.s32 32, 32
      %24 = vsyncadd [#allocation3], %s23
      %s25 = sshll.u32 [#allocation2], 4
      %s26 = int_to_ptr.vmem [resolvable:$true] %s25
      %31 = dma.hbm_to_vmem [thread:$0]  %s1, 32, %s26, [#allocation3], 16, 16, 1
    $region9: #{tpu_custom_call.1} parent=1 // pred_fallthru
      _
    // Predicated region
    $region10: #{tpu_custom_call.1} parent=1 // pred_check
      _
    $region11: #{tpu_custom_call.1} parent=1 // pred_check_branch
      %33 = sbr.rel (0) target = $region13
    $region12: #{tpu_custom_call.1} parent=1 // pred_region
      _
    $region13: #{tpu_custom_call.1} parent=1 // pred_fallthru
      _
    // Predicated region
    $region14: #{tpu_custom_call.1} parent=1 // pred_check
      _
    $region15: #{tpu_custom_call.1} parent=1 // pred_check_branch
      %35 = sbr.rel (0) target = $region17
    $region16: #{tpu_custom_call.1} parent=1 // pred_region
      _
    $region17: #{tpu_custom_call.1} parent=1 // pred_fallthru
      _
    // Predicated region
    $region18: #{tpu_custom_call.1} parent=1 // pred_check
      _
    $region19: #{tpu_custom_call.1} parent=1 // pred_check_branch
      %37 = sbr.rel (0) target = $region21
    $region20: #{tpu_custom_call.1} parent=1 // pred_region
      _
    $region21: #{tpu_custom_call.1} parent=1 // pred_fallthru
      _
    // Predicated region
    $region22: #{tpu_custom_call.1} parent=1 // pred_check
      _
    $region23: #{tpu_custom_call.1} parent=1 // pred_check_branch
      %39 = sbr.rel (0) target = $region25
    $region24: #{tpu_custom_call.1} parent=1 // pred_region
      %s41 = ssub.s32 256, 256
      %42 = vsyncadd [#allocation6], %s41
      %s43 = sshll.u32 [#allocation5], 4
      %s44 = int_to_ptr.vmem [resolvable:$true] %s43
      %49 = dma.hbm_to_vmem [thread:$0]  %s5, 256, %s44, [#allocation6], 64, 64, 4
    $region25: #{tpu_custom_call.1} parent=1 // pred_fallthru
      _
    // Predicated region
    $region26: #{tpu_custom_call.1} parent=1 // pred_check
      _
    $region27: #{tpu_custom_call.1} parent=1 // pred_check_branch
      %51 = sbr.rel (0) target = $region29
    $region28: #{tpu_custom_call.1} parent=1 // pred_region
      _
    $region29: #{tpu_custom_call.1} parent=1 // pred_fallthru
      _
    // Predicated region
    $region30: #{tpu_custom_call.1} parent=1 // pred_check
      _
    $region31: #{tpu_custom_call.1} parent=1 // pred_check_branch
      %53 = sbr.rel (0) target = $region33
    $region32: #{tpu_custom_call.1} parent=1 // pred_region
      %s55 = ssub.s32 256, 256
      %56 = vsyncadd [#allocation6], %s55
      %s57 = sshll.u32 [#allocation7], 4
      %s58 = int_to_ptr.vmem [resolvable:$true] %s57
      %63 = dma.hbm_to_vmem [thread:$0]  %s7, 256, %s58, [#allocation6], 64, 64, 4
    $region33: #{tpu_custom_call.1} parent=1 // pred_fallthru
      _
    // Predicated region
    $region34: #{tpu_custom_call.1} parent=1 // pred_check
      _
    $region35: #{tpu_custom_call.1} parent=1 // pred_check_branch
      %65 = sbr.rel (0) target = $region37
    $region36: #{tpu_custom_call.1} parent=1 // pred_region
      %s67 = ssub.s32 256, 256
      %68 = vsyncadd [#allocation9], %s67
      %s69 = sshll.u32 [#allocation8], 4
      %s70 = int_to_ptr.vmem [resolvable:$true] %s69
      %75 = dma.hbm_to_vmem [thread:$0]  %s8, 256, %s70, [#allocation9], 128, 128, 8
    $region37: #{tpu_custom_call.1} parent=1 // pred_fallthru
      _
    // Predicated region
    $region38: #{tpu_custom_call.1} parent=1 // pred_check
      _
    $region39: #{tpu_custom_call.1} parent=1 // pred_check_branch
      %77 = sbr.rel (0) target = $region41
    $region40: #{tpu_custom_call.1} parent=1 // pred_region
      %78 = dma.done [#allocation3], 32
    $region41: #{tpu_custom_call.1} parent=1 // pred_fallthru
      _
    // Predicated region
    $region42: #{tpu_custom_call.1} parent=1 // pred_check
      _
    $region43: #{tpu_custom_call.1} parent=1 // pred_check_branch
      %80 = sbr.rel (0) target = $region45
    $region44: #{tpu_custom_call.1} parent=1 // pred_region
      %81 = dma.done [#allocation6], 256
    $region45: #{tpu_custom_call.1} parent=1 // pred_fallthru
      _
    // Predicated region
    $region46: #{tpu_custom_call.1} parent=1 // pred_check
      _
    $region47: #{tpu_custom_call.1} parent=1 // pred_check_branch
      %83 = sbr.rel (0) target = $region49
    $region48: #{tpu_custom_call.1} parent=1 // pred_region
      %84 = dma.done [#allocation6], 256
    $region49: #{tpu_custom_call.1} parent=1 // pred_fallthru
      _
    // Predicated region
    $region50: #{tpu_custom_call.1} parent=1 // pred_check
      _
    $region51: #{tpu_custom_call.1} parent=1 // pred_check_branch
      %86 = sbr.rel (0) target = $region53
    $region52: #{tpu_custom_call.1} parent=1 // pred_region
      %87 = dma.done [#allocation9], 256
    $region53: #{tpu_custom_call.1} parent=1 // pred_fallthru
      _
    %v89 = vld [vmem:[%s0] sm:$0xff]
    %v90 = vld [vmem:[%s0 + $0x8] sm:$0xff]
    %v91 = vld [vmem:[#allocation8] sm:$0x1]
    %v92 = vld [vmem:[#allocation8 + $0x1] sm:$0x1]
    %v93 = vld [vmem:[#allocation8 + $0x2] sm:$0x1]
    %v94 = vld [vmem:[#allocation8 + $0x3] sm:$0x1]
    %v95 = vld [vmem:[#allocation8 + $0x4] sm:$0x1]
    %v96 = vld [vmem:[#allocation8 + $0x5] sm:$0x1]
    %v97 = vld [vmem:[#allocation8 + $0x6] sm:$0x1]
    %v98 = vld [vmem:[#allocation8 + $0x7] sm:$0x1]
    %v99 = vld [vmem:[#allocation8 + $0x8] sm:$0x1]
    %v100 = vpack.c.bf16 %v90, %v89
    %v101 = vld [vmem:[%s3] sm:$0xf]
    %v102 = vld [vmem:[%s3 + $0x4] sm:$0xf]
    %v103 = vld [vmem:[%s3 + $0x8] sm:$0xf]
    %v104 = vld [vmem:[%s3 + $0xc] sm:$0xf]
    %v105 = vlaneseq
    %v106 = vshrl.u32 %v105, 7
    %v107 = vsub.s32 0, %v106
    %v108 = vrot.slane %v91, %v107
    %v113 = vunpack.c.l.b16 %v101
    %v114 = vunpack.c.l.b16 %v102
    %v115 = vunpack.c.l.b16 %v103
    %v116 = vunpack.c.l.b16 %v104
    %v117 = vpack.c.b16 %v114, %v113
    %v118 = vpack.c.b16 %v116, %v115
    %vm121 = vcmask 261120
    %v123 = vsel %vm121, %v100, 0
    %125 = vmatprep.subr.bf16.mxu0 0
    %126 = vmatpush1.bf16.msra.mxu0 0
    %127 = vmatprep.subr.bf16.mxu0 0
    %128 = vmatpush1.bf16.msra.mxu0 0
    %129 = vmatprep.subr.bf16.mxu0 0
    %130 = vmatpush1.bf16.msra.mxu0 0
    %131 = vmatprep.subr.bf16.mxu0 0
    %132 = vmatpush1.bf16.msra.mxu0 0
    %133 = vmatprep.subr.bf16.mxu0 0
    %134 = vmatpush1.bf16.msra.mxu0 0
    %135 = vmatprep.subr.bf16.mxu0 0
    %136 = vmatpush1.bf16.msra.mxu0 0
    %137 = vmatprep.subr.bf16.mxu0 0
    %138 = vmatpush1.bf16.msra.mxu0 %v118
    %139 = vmatprep.subr.bf16.mxu0 0
    %140 = vmatpush1.bf16.msra.mxu0 %v117
    %141 = vmatprep.subr.bf16.mxu0 0
    %142 = vmatpush2.bf16.msra.mxu0 0
    %143 = vmatprep.subr.bf16.mxu0 0
    %144 = vmatpush2.bf16.msra.mxu0 0
    %145 = vmatprep.subr.bf16.mxu0 0
    %146 = vmatpush2.bf16.msra.mxu0 0
    %147 = vmatprep.subr.bf16.mxu0 0
    %148 = vmatpush2.bf16.msra.mxu0 0
    %149 = vmatprep.subr.bf16.mxu0 0
    %150 = vmatpush2.bf16.msra.mxu0 0
    %151 = vmatprep.subr.bf16.mxu0 0
    %152 = vmatpush2.bf16.msra.mxu0 0
    %153 = vmatprep.subr.bf16.mxu0 0
    %154 = vmatpush2.bf16.msra.mxu0 0
    %155 = vmatprep.subr.bf16.mxu0 0
    %156 = vmatpush2.bf16.msra.mxu0 0
    %157 = vmatprep.mubr.bf16.mxu0 0
    %158 = vmatmul.mubr.bf16.gmra.mxu0 %v123
    %v159 = vpop.f32.mrf.mxu0
    %v160 = vadd.f32 %v108, %v159
    %v161 = vpop.f32.mrf.mxu0
    %v162 = vpop.f32.mrf.mxu0
    %v163 = vadd.f32 %v108, %v162
    %v164 = vpop.f32.mrf.mxu0
    %165 = vdwg.mxu0
    %v166 = vld [vmem:[#allocation2] sm:$0x1]
    %v167 = vld [vmem:[#allocation2 + $0x1] sm:$0x1]
    %169 = vrot.lane.b32.xlu0 %v160, 96
    %v170 = vpop.permute.xlu0 %169
    %vm171 = vcmask 130048
    %v172 = vsel %vm171, %v160, 0
    %v174 = vsel %vm171, %v170, 0
    %176 = vmatprep.subr.mxu0 0.0
    %177 = vmatpush1.xpose.msra.mxu0 0.0
    %178 = vmatprep.subr.mxu0 0.0
    %179 = vmatpush1.xpose.msra.mxu0 0.0
    %180 = vmatprep.subr.mxu0 0.0
    %181 = vmatpush1.xpose.msra.mxu0 0.0
    %182 = vmatprep.subr.mxu0 0.0
    %183 = vmatpush1.xpose.msra.mxu0 0.0
    %184 = vmatprep.subr.mxu0 0.0
    %185 = vmatpush1.xpose.msra.mxu0 0.0
    %186 = vmatprep.subr.mxu0 0.0
    %187 = vmatpush1.xpose.msra.mxu0 0.0
    %188 = vmatprep.subr.mxu0 0.0
    %189 = vmatpush1.xpose.msra.mxu0 0.0
    %190 = vmatprep.subr.mxu0 0.0
    %191 = vmatpush1.xpose.msra.mxu0 0.0
    %192 = vmatprep.subr.mxu0 0.0
    %193 = vmatpush1.xpose.msra.mxu0 0.0
    %194 = vmatprep.subr.mxu0 0.0
    %195 = vmatpush1.xpose.msra.mxu0 0.0
    %196 = vmatprep.subr.mxu0 0.0
    %197 = vmatpush1.xpose.msra.mxu0 0.0
    %198 = vmatprep.subr.mxu0 0.0
    %199 = vmatpush1.xpose.msra.mxu0 0.0
    %200 = vmatprep.subr.mxu0 0.0
    %201 = vmatpush1.xpose.msra.mxu0 0.0
    %202 = vmatprep.subr.mxu0 0.0
    %203 = vmatpush1.xpose.msra.mxu0 0.0
    %204 = vmatprep.subr.mxu0 0.0
    %205 = vmatpush1.xpose.msra.mxu0 0.0
    %206 = vmatprep.subr.mxu0 0.0
    %207 = vmatpush1.xpose.msra.mxu0 %v174
    %208 = vmatprep.subr.mxu0 0.0
    %209 = vmatpush2.xpose.msra.mxu0 0.0
    %210 = vmatprep.subr.mxu0 0.0
    %211 = vmatpush2.xpose.msra.mxu0 0.0
    %212 = vmatprep.subr.mxu0 0.0
    %213 = vmatpush2.xpose.msra.mxu0 0.0
    %214 = vmatprep.subr.mxu0 0.0
    %215 = vmatpush2.xpose.msra.mxu0 0.0
    %216 = vmatprep.subr.mxu0 0.0
    %217 = vmatpush2.xpose.msra.mxu0 0.0
    %218 = vmatprep.subr.mxu0 0.0
    %219 = vmatpush2.xpose.msra.mxu0 0.0
    %220 = vmatprep.subr.mxu0 0.0
    %221 = vmatpush2.xpose.msra.mxu0 0.0
    %222 = vmatprep.subr.mxu0 0.0
    %223 = vmatpush2.xpose.msra.mxu0 0.0
    %224 = vmatprep.subr.mxu0 0.0
    %225 = vmatpush2.xpose.msra.mxu0 0.0
    %226 = vmatprep.subr.mxu0 0.0
    %227 = vmatpush2.xpose.msra.mxu0 0.0
    %228 = vmatprep.subr.mxu0 0.0
    %229 = vmatpush2.xpose.msra.mxu0 0.0
    %230 = vmatprep.subr.mxu0 0.0
    %231 = vmatpush2.xpose.msra.mxu0 0.0
    %232 = vmatprep.subr.mxu0 0.0
    %233 = vmatpush2.xpose.msra.mxu0 0.0
    %234 = vmatprep.subr.mxu0 0.0
    %235 = vmatpush2.xpose.msra.mxu0 0.0
    %236 = vmatprep.subr.mxu0 0.0
    %237 = vmatpush2.xpose.msra.mxu0 0.0
    %238 = vmatprep.subr.mxu0 0.0
    %239 = vmatpush2.xpose.msra.mxu0 0.0
    %240 = vmatprep.mubr.f32.mxu0 0.0
    %241 = vmatmul.mubr.f32.gmra.mxu0 %v172
    %v242 = vpop.f32.mrf.mxu0
    %v243 = vadd.f32 0.0, %v242
    %v244 = vpop.f32.mrf.mxu0
    %245 = vdwg.mxu0
    %247 = vrot.lane.b32.xlu0 %v163, 96
    %v248 = vpop.permute.xlu0 %247
    %v249 = vsel %vm171, %v163, 0
    %v251 = vsel %vm171, %v248, 0
    %253 = vmatprep.subr.mxu0 0.0
    %254 = vmatpush1.xpose.msra.mxu0 0.0
    %255 = vmatprep.subr.mxu0 0.0
    %256 = vmatpush1.xpose.msra.mxu0 0.0
    %257 = vmatprep.subr.mxu0 0.0
    %258 = vmatpush1.xpose.msra.mxu0 0.0
    %259 = vmatprep.subr.mxu0 0.0
    %260 = vmatpush1.xpose.msra.mxu0 0.0
    %261 = vmatprep.subr.mxu0 0.0
    %262 = vmatpush1.xpose.msra.mxu0 0.0
    %263 = vmatprep.subr.mxu0 0.0
    %264 = vmatpush1.xpose.msra.mxu0 0.0
    %265 = vmatprep.subr.mxu0 0.0
    %266 = vmatpush1.xpose.msra.mxu0 0.0
    %267 = vmatprep.subr.mxu0 0.0
    %268 = vmatpush1.xpose.msra.mxu0 0.0
    %269 = vmatprep.subr.mxu0 0.0
    %270 = vmatpush1.xpose.msra.mxu0 0.0
    %271 = vmatprep.subr.mxu0 0.0
    %272 = vmatpush1.xpose.msra.mxu0 0.0
    %273 = vmatprep.subr.mxu0 0.0
    %274 = vmatpush1.xpose.msra.mxu0 0.0
    %275 = vmatprep.subr.mxu0 0.0
    %276 = vmatpush1.xpose.msra.mxu0 0.0
    %277 = vmatprep.subr.mxu0 0.0
    %278 = vmatpush1.xpose.msra.mxu0 0.0
    %279 = vmatprep.subr.mxu0 0.0
    %280 = vmatpush1.xpose.msra.mxu0 0.0
    %281 = vmatprep.subr.mxu0 0.0
    %282 = vmatpush1.xpose.msra.mxu0 0.0
    %283 = vmatprep.subr.mxu0 0.0
    %284 = vmatpush1.xpose.msra.mxu0 %v251
    %285 = vmatprep.subr.mxu0 0.0
    %286 = vmatpush2.xpose.msra.mxu0 0.0
    %287 = vmatprep.subr.mxu0 0.0
    %288 = vmatpush2.xpose.msra.mxu0 0.0
    %289 = vmatprep.subr.mxu0 0.0
    %290 = vmatpush2.xpose.msra.mxu0 0.0
    %291 = vmatprep.subr.mxu0 0.0
    %292 = vmatpush2.xpose.msra.mxu0 0.0
    %293 = vmatprep.subr.mxu0 0.0
    %294 = vmatpush2.xpose.msra.mxu0 0.0
    %295 = vmatprep.subr.mxu0 0.0
    %296 = vmatpush2.xpose.msra.mxu0 0.0
    %297 = vmatprep.subr.mxu0 0.0
    %298 = vmatpush2.xpose.msra.mxu0 0.0
    %299 = vmatprep.subr.mxu0 0.0
    %300 = vmatpush2.xpose.msra.mxu0 0.0
    %301 = vmatprep.subr.mxu0 0.0
    %302 = vmatpush2.xpose.msra.mxu0 0.0
    %303 = vmatprep.subr.mxu0 0.0
    %304 = vmatpush2.xpose.msra.mxu0 0.0
    %305 = vmatprep.subr.mxu0 0.0
    %306 = vmatpush2.xpose.msra.mxu0 0.0
    %307 = vmatprep.subr.mxu0 0.0
    %308 = vmatpush2.xpose.msra.mxu0 0.0
    %309 = vmatprep.subr.mxu0 0.0
    %310 = vmatpush2.xpose.msra.mxu0 0.0
    %311 = vmatprep.subr.mxu0 0.0
    %312 = vmatpush2.xpose.msra.mxu0 0.0
    %313 = vmatprep.subr.mxu0 0.0
    %314 = vmatpush2.xpose.msra.mxu0 0.0
    %315 = vmatprep.subr.mxu0 0.0
    %316 = vmatpush2.xpose.msra.mxu0 0.0
    %317 = vmatprep.mubr.f32.mxu0 0.0
    %318 = vmatmul.mubr.f32.gmra.mxu0 %v249
    %v319 = vpop.f32.mrf.mxu0
    %v320 = vadd.f32 0.0, %v319
    %v321 = vpop.f32.mrf.mxu0
    %322 = vdwg.mxu0
    %v323 = vmul.f32 %v243, 0.25
    %v324 = vmul.f32 %v320, 0.25
    %v327 = vlaneseq
    %v328 = vshrl.u32 %v327, 7
    %v329 = vsub.s32 0, %v328
    %v330 = vrot.slane %v166, %v329
    %v331 = vlaneseq
    %v332 = vshrl.u32 %v331, 7
    %v333 = vsub.s32 0, %v332
    %v334 = vrot.slane %v167, %v333
    %v337 = vadd.f32 %v323, %v330
    %v338 = vadd.f32 %v324, %v334
    %vm339 = vcmask 64512
    %v340 = vsel %vm339, %v337, -inf
    %341 = vmax.xlane.f32.xlu0 %v340
    %v342 = vpop.xlane.xlu0 %341
    %v343 = vsel %vm339, %v338, -inf
    %344 = vmax.xlane.f32.xlu0 %v343
    %v345 = vpop.xlane.xlu0 %344
    %v346 = vsub.f32 %v337, %v342
    %v347 = vsub.f32 %v338, %v345
    %v348 = vmul.f32 %v346, 1.442695
    %v349 = vpow.pop %v348
    %v350 = vmul.f32 %v347, 1.442695
    %v351 = vpow.pop %v350
    %v352 = vsel %vm339, %v349, 0.0
    %353 = vadd.xlane.f32.xlu0 %v352
    %v354 = vpop.xlane.xlu0 %353
    %v355 = vsel %vm339, %v351, 0.0
    %356 = vadd.xlane.f32.xlu0 %v355
    %v357 = vpop.xlane.xlu0 %356
    %v358 = vrcp.pop %v354
    %v359 = vmul.f32 %v349, %v358
    %v360 = vrcp.pop %v357
    %v361 = vmul.f32 %v351, %v360
    %362 = vrot.lane.b32.xlu0 %v160, 64
    %v363 = vpop.permute.xlu0 %362
    %v366 = vsel %vm339, %v359, 0
    %368 = vmatprep.subr.mxu0 0.0
    %369 = vmatpush1.msra.mxu0 0.0
    %370 = vmatprep.subr.mxu0 0.0
    %371 = vmatpush1.msra.mxu0 0.0
    %372 = vmatprep.subr.mxu0 0.0
    %373 = vmatpush1.msra.mxu0 0.0
    %374 = vmatprep.subr.mxu0 0.0
    %375 = vmatpush1.msra.mxu0 0.0
    %376 = vmatprep.subr.mxu0 0.0
    %377 = vmatpush1.msra.mxu0 0.0
    %378 = vmatprep.subr.mxu0 0.0
    %379 = vmatpush1.msra.mxu0 0.0
    %380 = vmatprep.subr.mxu0 0.0
    %381 = vmatpush1.msra.mxu0 0.0
    %382 = vmatprep.subr.mxu0 0.0
    %383 = vmatpush1.msra.mxu0 0.0
    %384 = vmatprep.subr.mxu0 0.0
    %385 = vmatpush1.msra.mxu0 0.0
    %386 = vmatprep.subr.mxu0 0.0
    %387 = vmatpush1.msra.mxu0 0.0
    %388 = vmatprep.subr.mxu0 0.0
    %389 = vmatpush1.msra.mxu0 0.0
    %390 = vmatprep.subr.mxu0 0.0
    %391 = vmatpush1.msra.mxu0 0.0
    %392 = vmatprep.subr.mxu0 0.0
    %393 = vmatpush1.msra.mxu0 0.0
    %394 = vmatprep.subr.mxu0 0.0
    %395 = vmatpush1.msra.mxu0 0.0
    %396 = vmatprep.subr.mxu0 0.0
    %397 = vmatpush1.msra.mxu0 0.0
    %398 = vmatprep.subr.mxu0 0.0
    %399 = vmatpush1.msra.mxu0 %v363
    %400 = vmatprep.subr.mxu0 0.0
    %401 = vmatpush2.msra.mxu0 0.0
    %402 = vmatprep.subr.mxu0 0.0
    %403 = vmatpush2.msra.mxu0 0.0
    %404 = vmatprep.subr.mxu0 0.0
    %405 = vmatpush2.msra.mxu0 0.0
    %406 = vmatprep.subr.mxu0 0.0
    %407 = vmatpush2.msra.mxu0 0.0
    %408 = vmatprep.subr.mxu0 0.0
    %409 = vmatpush2.msra.mxu0 0.0
    %410 = vmatprep.subr.mxu0 0.0
    %411 = vmatpush2.msra.mxu0 0.0
    %412 = vmatprep.subr.mxu0 0.0
    %413 = vmatpush2.msra.mxu0 0.0
    %414 = vmatprep.subr.mxu0 0.0
    %415 = vmatpush2.msra.mxu0 0.0
    %416 = vmatprep.subr.mxu0 0.0
    %417 = vmatpush2.msra.mxu0 0.0
    %418 = vmatprep.subr.mxu0 0.0
    %419 = vmatpush2.msra.mxu0 0.0
    %420 = vmatprep.subr.mxu0 0.0
    %421 = vmatpush2.msra.mxu0 0.0
    %422 = vmatprep.subr.mxu0 0.0
    %423 = vmatpush2.msra.mxu0 0.0
    %424 = vmatprep.subr.mxu0 0.0
    %425 = vmatpush2.msra.mxu0 0.0
    %426 = vmatprep.subr.mxu0 0.0
    %427 = vmatpush2.msra.mxu0 0.0
    %428 = vmatprep.subr.mxu0 0.0
    %429 = vmatpush2.msra.mxu0 0.0
    %430 = vmatprep.subr.mxu0 0.0
    %431 = vmatpush2.msra.mxu0 0.0
    %432 = vmatprep.mubr.f32.mxu0 0.0
    %433 = vmatmul.mubr.f32.gmra.mxu0 %v366
    %v434 = vpop.f32.mrf.mxu0
    %v435 = vadd.f32 0.0, %v434
    %v436 = vpop.f32.mrf.mxu0
    %437 = vdwg.mxu0
    %438 = vrot.lane.b32.xlu0 %v163, 64
    %v439 = vpop.permute.xlu0 %438
    %v442 = vsel %vm339, %v361, 0
    %444 = vmatprep.subr.mxu0 0.0
    %445 = vmatpush1.msra.mxu0 0.0
    %446 = vmatprep.subr.mxu0 0.0
    %447 = vmatpush1.msra.mxu0 0.0
    %448 = vmatprep.subr.mxu0 0.0
    %449 = vmatpush1.msra.mxu0 0.0
    %450 = vmatprep.subr.mxu0 0.0
    %451 = vmatpush1.msra.mxu0 0.0
    %452 = vmatprep.subr.mxu0 0.0
    %453 = vmatpush1.msra.mxu0 0.0
    %454 = vmatprep.subr.mxu0 0.0
    %455 = vmatpush1.msra.mxu0 0.0
    %456 = vmatprep.subr.mxu0 0.0
    %457 = vmatpush1.msra.mxu0 0.0
    %458 = vmatprep.subr.mxu0 0.0
    %459 = vmatpush1.msra.mxu0 0.0
    %460 = vmatprep.subr.mxu0 0.0
    %461 = vmatpush1.msra.mxu0 0.0
    %462 = vmatprep.subr.mxu0 0.0
    %463 = vmatpush1.msra.mxu0 0.0
    %464 = vmatprep.subr.mxu0 0.0
    %465 = vmatpush1.msra.mxu0 0.0
    %466 = vmatprep.subr.mxu0 0.0
    %467 = vmatpush1.msra.mxu0 0.0
    %468 = vmatprep.subr.mxu0 0.0
    %469 = vmatpush1.msra.mxu0 0.0
    %470 = vmatprep.subr.mxu0 0.0
    %471 = vmatpush1.msra.mxu0 0.0
    %472 = vmatprep.subr.mxu0 0.0
    %473 = vmatpush1.msra.mxu0 0.0
    %474 = vmatprep.subr.mxu0 0.0
    %475 = vmatpush1.msra.mxu0 %v439
    %476 = vmatprep.subr.mxu0 0.0
    %477 = vmatpush2.msra.mxu0 0.0
    %478 = vmatprep.subr.mxu0 0.0
    %479 = vmatpush2.msra.mxu0 0.0
    %480 = vmatprep.subr.mxu0 0.0
    %481 = vmatpush2.msra.mxu0 0.0
    %482 = vmatprep.subr.mxu0 0.0
    %483 = vmatpush2.msra.mxu0 0.0
    %484 = vmatprep.subr.mxu0 0.0
    %485 = vmatpush2.msra.mxu0 0.0
    %486 = vmatprep.subr.mxu0 0.0
    %487 = vmatpush2.msra.mxu0 0.0
    %488 = vmatprep.subr.mxu0 0.0
    %489 = vmatpush2.msra.mxu0 0.0
    %490 = vmatprep.subr.mxu0 0.0
    %491 = vmatpush2.msra.mxu0 0.0
    %492 = vmatprep.subr.mxu0 0.0
    %493 = vmatpush2.msra.mxu0 0.0
    %494 = vmatprep.subr.mxu0 0.0
    %495 = vmatpush2.msra.mxu0 0.0
    %496 = vmatprep.subr.mxu0 0.0
    %497 = vmatpush2.msra.mxu0 0.0
    %498 = vmatprep.subr.mxu0 0.0
    %499 = vmatpush2.msra.mxu0 0.0
    %500 = vmatprep.subr.mxu0 0.0
    %501 = vmatpush2.msra.mxu0 0.0
    %502 = vmatprep.subr.mxu0 0.0
    %503 = vmatpush2.msra.mxu0 0.0
    %504 = vmatprep.subr.mxu0 0.0
    %505 = vmatpush2.msra.mxu0 0.0
    %506 = vmatprep.subr.mxu0 0.0
    %507 = vmatpush2.msra.mxu0 0.0
    %508 = vmatprep.mubr.f32.mxu0 0.0
    %509 = vmatmul.mubr.f32.gmra.mxu0 %v442
    %v510 = vpop.f32.mrf.mxu0
    %v511 = vadd.f32 0.0, %v510
    %v512 = vpop.f32.mrf.mxu0
    %513 = vdwg.mxu0
    %v514 = vpack.c.bf16 %v511, %v435
    %v515 = vld [vmem:[%s4] sm:$0xf]
    %v516 = vld [vmem:[%s4 + $0x4] sm:$0xf]
    %517 = vrot.lane.b32.xlu0 %v160, 112
    %v518 = vpop.permute.xlu0 %517
    %519 = vrot.lane.b32.xlu0 %v160, 80
    %v520 = vpop.permute.xlu0 %519
    %v521 = vsel %vm171, %v518, 0
    %v523 = vsel %vm171, %v520, 0
    %525 = vmatprep.subr.mxu0 0.0
    %526 = vmatpush1.xpose.msra.mxu0 0.0
    %527 = vmatprep.subr.mxu0 0.0
    %528 = vmatpush1.xpose.msra.mxu0 0.0
    %529 = vmatprep.subr.mxu0 0.0
    %530 = vmatpush1.xpose.msra.mxu0 0.0
    %531 = vmatprep.subr.mxu0 0.0
    %532 = vmatpush1.xpose.msra.mxu0 0.0
    %533 = vmatprep.subr.mxu0 0.0
    %534 = vmatpush1.xpose.msra.mxu0 0.0
    %535 = vmatprep.subr.mxu0 0.0
    %536 = vmatpush1.xpose.msra.mxu0 0.0
    %537 = vmatprep.subr.mxu0 0.0
    %538 = vmatpush1.xpose.msra.mxu0 0.0
    %539 = vmatprep.subr.mxu0 0.0
    %540 = vmatpush1.xpose.msra.mxu0 0.0
    %541 = vmatprep.subr.mxu0 0.0
    %542 = vmatpush1.xpose.msra.mxu0 0.0
    %543 = vmatprep.subr.mxu0 0.0
    %544 = vmatpush1.xpose.msra.mxu0 0.0
    %545 = vmatprep.subr.mxu0 0.0
    %546 = vmatpush1.xpose.msra.mxu0 0.0
    %547 = vmatprep.subr.mxu0 0.0
    %548 = vmatpush1.xpose.msra.mxu0 0.0
    %549 = vmatprep.subr.mxu0 0.0
    %550 = vmatpush1.xpose.msra.mxu0 0.0
    %551 = vmatprep.subr.mxu0 0.0
    %552 = vmatpush1.xpose.msra.mxu0 0.0
    %553 = vmatprep.subr.mxu0 0.0
    %554 = vmatpush1.xpose.msra.mxu0 0.0
    %555 = vmatprep.subr.mxu0 0.0
    %556 = vmatpush1.xpose.msra.mxu0 %v523
    %557 = vmatprep.subr.mxu0 0.0
    %558 = vmatpush2.xpose.msra.mxu0 0.0
    %559 = vmatprep.subr.mxu0 0.0
    %560 = vmatpush2.xpose.msra.mxu0 0.0
    %561 = vmatprep.subr.mxu0 0.0
    %562 = vmatpush2.xpose.msra.mxu0 0.0
    %563 = vmatprep.subr.mxu0 0.0
    %564 = vmatpush2.xpose.msra.mxu0 0.0
    %565 = vmatprep.subr.mxu0 0.0
    %566 = vmatpush2.xpose.msra.mxu0 0.0
    %567 = vmatprep.subr.mxu0 0.0
    %568 = vmatpush2.xpose.msra.mxu0 0.0
    %569 = vmatprep.subr.mxu0 0.0
    %570 = vmatpush2.xpose.msra.mxu0 0.0
    %571 = vmatprep.subr.mxu0 0.0
    %572 = vmatpush2.xpose.msra.mxu0 0.0
    %573 = vmatprep.subr.mxu0 0.0
    %574 = vmatpush2.xpose.msra.mxu0 0.0
    %575 = vmatprep.subr.mxu0 0.0
    %576 = vmatpush2.xpose.msra.mxu0 0.0
    %577 = vmatprep.subr.mxu0 0.0
    %578 = vmatpush2.xpose.msra.mxu0 0.0
    %579 = vmatprep.subr.mxu0 0.0
    %580 = vmatpush2.xpose.msra.mxu0 0.0
    %581 = vmatprep.subr.mxu0 0.0
    %582 = vmatpush2.xpose.msra.mxu0 0.0
    %583 = vmatprep.subr.mxu0 0.0
    %584 = vmatpush2.xpose.msra.mxu0 0.0
    %585 = vmatprep.subr.mxu0 0.0
    %586 = vmatpush2.xpose.msra.mxu0 0.0
    %587 = vmatprep.subr.mxu0 0.0
    %588 = vmatpush2.xpose.msra.mxu0 0.0
    %589 = vmatprep.mubr.f32.mxu0 0.0
    %590 = vmatmul.mubr.f32.gmra.mxu0 %v521
    %v591 = vpop.f32.mrf.mxu0
    %v592 = vadd.f32 0.0, %v591
    %v593 = vpop.f32.mrf.mxu0
    %594 = vdwg.mxu0
    %595 = vrot.lane.b32.xlu0 %v163, 112
    %v596 = vpop.permute.xlu0 %595
    %597 = vrot.lane.b32.xlu0 %v163, 80
    %v598 = vpop.permute.xlu0 %597
    %v599 = vsel %vm171, %v596, 0
    %v601 = vsel %vm171, %v598, 0
    %603 = vmatprep.subr.mxu0 0.0
    %604 = vmatpush1.xpose.msra.mxu0 0.0
    %605 = vmatprep.subr.mxu0 0.0
    %606 = vmatpush1.xpose.msra.mxu0 0.0
    %607 = vmatprep.subr.mxu0 0.0
    %608 = vmatpush1.xpose.msra.mxu0 0.0
    %609 = vmatprep.subr.mxu0 0.0
    %610 = vmatpush1.xpose.msra.mxu0 0.0
    %611 = vmatprep.subr.mxu0 0.0
    %612 = vmatpush1.xpose.msra.mxu0 0.0
    %613 = vmatprep.subr.mxu0 0.0
    %614 = vmatpush1.xpose.msra.mxu0 0.0
    %615 = vmatprep.subr.mxu0 0.0
    %616 = vmatpush1.xpose.msra.mxu0 0.0
    %617 = vmatprep.subr.mxu0 0.0
    %618 = vmatpush1.xpose.msra.mxu0 0.0
    %619 = vmatprep.subr.mxu0 0.0
    %620 = vmatpush1.xpose.msra.mxu0 0.0
    %621 = vmatprep.subr.mxu0 0.0
    %622 = vmatpush1.xpose.msra.mxu0 0.0
    %623 = vmatprep.subr.mxu0 0.0
    %624 = vmatpush1.xpose.msra.mxu0 0.0
    %625 = vmatprep.subr.mxu0 0.0
    %626 = vmatpush1.xpose.msra.mxu0 0.0
    %627 = vmatprep.subr.mxu0 0.0
    %628 = vmatpush1.xpose.msra.mxu0 0.0
    %629 = vmatprep.subr.mxu0 0.0
    %630 = vmatpush1.xpose.msra.mxu0 0.0
    %631 = vmatprep.subr.mxu0 0.0
    %632 = vmatpush1.xpose.msra.mxu0 0.0
    %633 = vmatprep.subr.mxu0 0.0
    %634 = vmatpush1.xpose.msra.mxu0 %v601
    %635 = vmatprep.subr.mxu0 0.0
    %636 = vmatpush2.xpose.msra.mxu0 0.0
    %637 = vmatprep.subr.mxu0 0.0
    %638 = vmatpush2.xpose.msra.mxu0 0.0
    %639 = vmatprep.subr.mxu0 0.0
    %640 = vmatpush2.xpose.msra.mxu0 0.0
    %641 = vmatprep.subr.mxu0 0.0
    %642 = vmatpush2.xpose.msra.mxu0 0.0
    %643 = vmatprep.subr.mxu0 0.0
    %644 = vmatpush2.xpose.msra.mxu0 0.0
    %645 = vmatprep.subr.mxu0 0.0
    %646 = vmatpush2.xpose.msra.mxu0 0.0
    %647 = vmatprep.subr.mxu0 0.0
    %648 = vmatpush2.xpose.msra.mxu0 0.0
    %649 = vmatprep.subr.mxu0 0.0
    %650 = vmatpush2.xpose.msra.mxu0 0.0
    %651 = vmatprep.subr.mxu0 0.0
    %652 = vmatpush2.xpose.msra.mxu0 0.0
    %653 = vmatprep.subr.mxu0 0.0
    %654 = vmatpush2.xpose.msra.mxu0 0.0
    %655 = vmatprep.subr.mxu0 0.0
    %656 = vmatpush2.xpose.msra.mxu0 0.0
    %657 = vmatprep.subr.mxu0 0.0
    %658 = vmatpush2.xpose.msra.mxu0 0.0
    %659 = vmatprep.subr.mxu0 0.0
    %660 = vmatpush2.xpose.msra.mxu0 0.0
    %661 = vmatprep.subr.mxu0 0.0
    %662 = vmatpush2.xpose.msra.mxu0 0.0
    %663 = vmatprep.subr.mxu0 0.0
    %664 = vmatpush2.xpose.msra.mxu0 0.0
    %665 = vmatprep.subr.mxu0 0.0
    %666 = vmatpush2.xpose.msra.mxu0 0.0
    %667 = vmatprep.mubr.f32.mxu0 0.0
    %668 = vmatmul.mubr.f32.gmra.mxu0 %v599
    %v669 = vpop.f32.mrf.mxu0
    %v670 = vadd.f32 0.0, %v669
    %v671 = vpop.f32.mrf.mxu0
    %672 = vdwg.mxu0
    %v673 = vmul.f32 %v592, 0.25
    %v674 = vmul.f32 %v670, 0.25
    %v675 = vadd.f32 %v673, %v330
    %v676 = vadd.f32 %v674, %v334
    %v677 = vsel %vm339, %v675, -inf
    %678 = vmax.xlane.f32.xlu0 %v677
    %v679 = vpop.xlane.xlu0 %678
    %v680 = vsel %vm339, %v676, -inf
    %681 = vmax.xlane.f32.xlu0 %v680
    %v682 = vpop.xlane.xlu0 %681
    %v683 = vsub.f32 %v675, %v679
    %v684 = vsub.f32 %v676, %v682
    %v685 = vmul.f32 %v683, 1.442695
    %v686 = vpow.pop %v685
    %v687 = vmul.f32 %v684, 1.442695
    %v688 = vpow.pop %v687
    %v689 = vsel %vm339, %v686, 0.0
    %690 = vadd.xlane.f32.xlu0 %v689
    %v691 = vpop.xlane.xlu0 %690
    %v692 = vsel %vm339, %v688, 0.0
    %693 = vadd.xlane.f32.xlu0 %v692
    %v694 = vpop.xlane.xlu0 %693
    %v695 = vrcp.pop %v691
    %v696 = vmul.f32 %v686, %v695
    %v697 = vrcp.pop %v694
    %v698 = vmul.f32 %v688, %v697
    %699 = vrot.lane.b32.xlu0 %v160, 48
    %v700 = vpop.permute.xlu0 %699
    %v703 = vsel %vm339, %v696, 0
    %705 = vmatprep.subr.mxu0 0.0
    %706 = vmatpush1.msra.mxu0 0.0
    %707 = vmatprep.subr.mxu0 0.0
    %708 = vmatpush1.msra.mxu0 0.0
    %709 = vmatprep.subr.mxu0 0.0
    %710 = vmatpush1.msra.mxu0 0.0
    %711 = vmatprep.subr.mxu0 0.0
    %712 = vmatpush1.msra.mxu0 0.0
    %713 = vmatprep.subr.mxu0 0.0
    %714 = vmatpush1.msra.mxu0 0.0
    %715 = vmatprep.subr.mxu0 0.0
    %716 = vmatpush1.msra.mxu0 0.0
    %717 = vmatprep.subr.mxu0 0.0
    %718 = vmatpush1.msra.mxu0 0.0
    %719 = vmatprep.subr.mxu0 0.0
    %720 = vmatpush1.msra.mxu0 0.0
    %721 = vmatprep.subr.mxu0 0.0
    %722 = vmatpush1.msra.mxu0 0.0
    %723 = vmatprep.subr.mxu0 0.0
    %724 = vmatpush1.msra.mxu0 0.0
    %725 = vmatprep.subr.mxu0 0.0
    %726 = vmatpush1.msra.mxu0 0.0
    %727 = vmatprep.subr.mxu0 0.0
    %728 = vmatpush1.msra.mxu0 0.0
    %729 = vmatprep.subr.mxu0 0.0
    %730 = vmatpush1.msra.mxu0 0.0
    %731 = vmatprep.subr.mxu0 0.0
    %732 = vmatpush1.msra.mxu0 0.0
    %733 = vmatprep.subr.mxu0 0.0
    %734 = vmatpush1.msra.mxu0 0.0
    %735 = vmatprep.subr.mxu0 0.0
    %736 = vmatpush1.msra.mxu0 %v700
    %737 = vmatprep.subr.mxu0 0.0
    %738 = vmatpush2.msra.mxu0 0.0
    %739 = vmatprep.subr.mxu0 0.0
    %740 = vmatpush2.msra.mxu0 0.0
    %741 = vmatprep.subr.mxu0 0.0
    %742 = vmatpush2.msra.mxu0 0.0
    %743 = vmatprep.subr.mxu0 0.0
    %744 = vmatpush2.msra.mxu0 0.0
    %745 = vmatprep.subr.mxu0 0.0
    %746 = vmatpush2.msra.mxu0 0.0
    %747 = vmatprep.subr.mxu0 0.0
    %748 = vmatpush2.msra.mxu0 0.0
    %749 = vmatprep.subr.mxu0 0.0
    %750 = vmatpush2.msra.mxu0 0.0
    %751 = vmatprep.subr.mxu0 0.0
    %752 = vmatpush2.msra.mxu0 0.0
    %753 = vmatprep.subr.mxu0 0.0
    %754 = vmatpush2.msra.mxu0 0.0
    %755 = vmatprep.subr.mxu0 0.0
    %756 = vmatpush2.msra.mxu0 0.0
    %757 = vmatprep.subr.mxu0 0.0
    %758 = vmatpush2.msra.mxu0 0.0
    %759 = vmatprep.subr.mxu0 0.0
    %760 = vmatpush2.msra.mxu0 0.0
    %761 = vmatprep.subr.mxu0 0.0
    %762 = vmatpush2.msra.mxu0 0.0
    %763 = vmatprep.subr.mxu0 0.0
    %764 = vmatpush2.msra.mxu0 0.0
    %765 = vmatprep.subr.mxu0 0.0
    %766 = vmatpush2.msra.mxu0 0.0
    %767 = vmatprep.subr.mxu0 0.0
    %768 = vmatpush2.msra.mxu0 0.0
    %769 = vmatprep.mubr.f32.mxu0 0.0
    %770 = vmatmul.mubr.f32.gmra.mxu0 %v703
    %v771 = vpop.f32.mrf.mxu0
    %v772 = vadd.f32 0.0, %v771
    %v773 = vpop.f32.mrf.mxu0
    %774 = vdwg.mxu0
    %775 = vrot.lane.b32.xlu0 %v163, 48
    %v776 = vpop.permute.xlu0 %775
    %v779 = vsel %vm339, %v698, 0
    %781 = vmatprep.subr.mxu0 0.0
    %782 = vmatpush1.msra.mxu0 0.0
    %783 = vmatprep.subr.mxu0 0.0
    %784 = vmatpush1.msra.mxu0 0.0
    %785 = vmatprep.subr.mxu0 0.0
    %786 = vmatpush1.msra.mxu0 0.0
    %787 = vmatprep.subr.mxu0 0.0
    %788 = vmatpush1.msra.mxu0 0.0
    %789 = vmatprep.subr.mxu0 0.0
    %790 = vmatpush1.msra.mxu0 0.0
    %791 = vmatprep.subr.mxu0 0.0
    %792 = vmatpush1.msra.mxu0 0.0
    %793 = vmatprep.subr.mxu0 0.0
    %794 = vmatpush1.msra.mxu0 0.0
    %795 = vmatprep.subr.mxu0 0.0
    %796 = vmatpush1.msra.mxu0 0.0
    %797 = vmatprep.subr.mxu0 0.0
    %798 = vmatpush1.msra.mxu0 0.0
    %799 = vmatprep.subr.mxu0 0.0
    %800 = vmatpush1.msra.mxu0 0.0
    %801 = vmatprep.subr.mxu0 0.0
    %802 = vmatpush1.msra.mxu0 0.0
    %803 = vmatprep.subr.mxu0 0.0
    %804 = vmatpush1.msra.mxu0 0.0
    %805 = vmatprep.subr.mxu0 0.0
    %806 = vmatpush1.msra.mxu0 0.0
    %807 = vmatprep.subr.mxu0 0.0
    %808 = vmatpush1.msra.mxu0 0.0
    %809 = vmatprep.subr.mxu0 0.0
    %810 = vmatpush1.msra.mxu0 0.0
    %811 = vmatprep.subr.mxu0 0.0
    %812 = vmatpush1.msra.mxu0 %v776
    %813 = vmatprep.subr.mxu0 0.0
    %814 = vmatpush2.msra.mxu0 0.0
    %815 = vmatprep.subr.mxu0 0.0
    %816 = vmatpush2.msra.mxu0 0.0
    %817 = vmatprep.subr.mxu0 0.0
    %818 = vmatpush2.msra.mxu0 0.0
    %819 = vmatprep.subr.mxu0 0.0
    %820 = vmatpush2.msra.mxu0 0.0
    %821 = vmatprep.subr.mxu0 0.0
    %822 = vmatpush2.msra.mxu0 0.0
    %823 = vmatprep.subr.mxu0 0.0
    %824 = vmatpush2.msra.mxu0 0.0
    %825 = vmatprep.subr.mxu0 0.0
    %826 = vmatpush2.msra.mxu0 0.0
    %827 = vmatprep.subr.mxu0 0.0
    %828 = vmatpush2.msra.mxu0 0.0
    %829 = vmatprep.subr.mxu0 0.0
    %830 = vmatpush2.msra.mxu0 0.0
    %831 = vmatprep.subr.mxu0 0.0
    %832 = vmatpush2.msra.mxu0 0.0
    %833 = vmatprep.subr.mxu0 0.0
    %834 = vmatpush2.msra.mxu0 0.0
    %835 = vmatprep.subr.mxu0 0.0
    %836 = vmatpush2.msra.mxu0 0.0
    %837 = vmatprep.subr.mxu0 0.0
    %838 = vmatpush2.msra.mxu0 0.0
    %839 = vmatprep.subr.mxu0 0.0
    %840 = vmatpush2.msra.mxu0 0.0
    %841 = vmatprep.subr.mxu0 0.0
    %842 = vmatpush2.msra.mxu0 0.0
    %843 = vmatprep.subr.mxu0 0.0
    %844 = vmatpush2.msra.mxu0 0.0
    %845 = vmatprep.mubr.f32.mxu0 0.0
    %846 = vmatmul.mubr.f32.gmra.mxu0 %v779
    %v847 = vpop.f32.mrf.mxu0
    %v848 = vadd.f32 0.0, %v847
    %v849 = vpop.f32.mrf.mxu0
    %850 = vdwg.mxu0
    %v851 = vpack.c.bf16 %v848, %v772
    %v852 = vld [vmem:[%s4 + $0x8] sm:$0xf]
    %v853 = vld [vmem:[%s4 + $0xc] sm:$0xf]
    %v856 = vunpack.c.l.b16 %v852
    %v857 = vunpack.c.l.b16 %v853
    %v858 = vpack.c.b16 %v857, %v856
    %v861 = vsel %vm171, %v851, 0
    %863 = vmatprep.subr.bf16.mxu0 0
    %864 = vmatpush1.bf16.msra.mxu0 0
    %865 = vmatprep.subr.bf16.mxu0 0
    %866 = vmatpush1.bf16.msra.mxu0 0
    %867 = vmatprep.subr.bf16.mxu0 0
    %868 = vmatpush1.bf16.msra.mxu0 0
    %869 = vmatprep.subr.bf16.mxu0 0
    %870 = vmatpush1.bf16.msra.mxu0 0
    %871 = vmatprep.subr.bf16.mxu0 0
    %872 = vmatpush1.bf16.msra.mxu0 0
    %873 = vmatprep.subr.bf16.mxu0 0
    %874 = vmatpush1.bf16.msra.mxu0 0
    %875 = vmatprep.subr.bf16.mxu0 0
    %876 = vmatpush1.bf16.msra.mxu0 0
    %877 = vmatprep.subr.bf16.mxu0 0
    %878 = vmatpush1.bf16.msra.mxu0 %v858
    %879 = vmatprep.subr.bf16.mxu0 0
    %880 = vmatpush2.bf16.msra.mxu0 0
    %881 = vmatprep.subr.bf16.mxu0 0
    %882 = vmatpush2.bf16.msra.mxu0 0
    %883 = vmatprep.subr.bf16.mxu0 0
    %884 = vmatpush2.bf16.msra.mxu0 0
    %885 = vmatprep.subr.bf16.mxu0 0
    %886 = vmatpush2.bf16.msra.mxu0 0
    %887 = vmatprep.subr.bf16.mxu0 0
    %888 = vmatpush2.bf16.msra.mxu0 0
    %889 = vmatprep.subr.bf16.mxu0 0
    %890 = vmatpush2.bf16.msra.mxu0 0
    %891 = vmatprep.subr.bf16.mxu0 0
    %892 = vmatpush2.bf16.msra.mxu0 0
    %893 = vmatprep.subr.bf16.mxu0 0
    %894 = vmatpush2.bf16.msra.mxu0 0
    %895 = vmatprep.mubr.bf16.mxu0 0
    %896 = vmatmul.mubr.bf16.gmra.mxu0 %v861
    %v897 = vpop.f32.mrf.mxu0
    %v898 = vadd.f32 0.0, %v897
    %v899 = vpop.f32.mrf.mxu0
    %v900 = vpop.f32.mrf.mxu0
    %v901 = vadd.f32 0.0, %v900
    %v902 = vpop.f32.mrf.mxu0
    %903 = vdwg.mxu0
    %v906 = vunpack.c.l.b16 %v515
    %v907 = vunpack.c.l.b16 %v516
    %v908 = vpack.c.b16 %v907, %v906
    %v911 = vsel %vm171, %v514, 0
    %913 = vmatprep.subr.bf16.mxu0 0
    %914 = vmatpush1.bf16.msra.mxu0 0
    %915 = vmatprep.subr.bf16.mxu0 0
    %916 = vmatpush1.bf16.msra.mxu0 0
    %917 = vmatprep.subr.bf16.mxu0 0
    %918 = vmatpush1.bf16.msra.mxu0 0
    %919 = vmatprep.subr.bf16.mxu0 0
    %920 = vmatpush1.bf16.msra.mxu0 0
    %921 = vmatprep.subr.bf16.mxu0 0
    %922 = vmatpush1.bf16.msra.mxu0 0
    %923 = vmatprep.subr.bf16.mxu0 0
    %924 = vmatpush1.bf16.msra.mxu0 0
    %925 = vmatprep.subr.bf16.mxu0 0
    %926 = vmatpush1.bf16.msra.mxu0 0
    %927 = vmatprep.subr.bf16.mxu0 0
    %928 = vmatpush1.bf16.msra.mxu0 %v908
    %929 = vmatprep.subr.bf16.mxu0 0
    %930 = vmatpush2.bf16.msra.mxu0 0
    %931 = vmatprep.subr.bf16.mxu0 0
    %932 = vmatpush2.bf16.msra.mxu0 0
    %933 = vmatprep.subr.bf16.mxu0 0
    %934 = vmatpush2.bf16.msra.mxu0 0
    %935 = vmatprep.subr.bf16.mxu0 0
    %936 = vmatpush2.bf16.msra.mxu0 0
    %937 = vmatprep.subr.bf16.mxu0 0
    %938 = vmatpush2.bf16.msra.mxu0 0
    %939 = vmatprep.subr.bf16.mxu0 0
    %940 = vmatpush2.bf16.msra.mxu0 0
    %941 = vmatprep.subr.bf16.mxu0 0
    %942 = vmatpush2.bf16.msra.mxu0 0
    %943 = vmatprep.subr.bf16.mxu0 0
    %944 = vmatpush2.bf16.msra.mxu0 0
    %945 = vmatprep.mubr.bf16.mxu0 0
    %946 = vmatmul.mubr.bf16.gmra.mxu0 %v911
    %v947 = vpop.f32.mrf.mxu0
    %v948 = vadd.f32 %v898, %v947
    %v949 = vpop.f32.mrf.mxu0
    %v950 = vpop.f32.mrf.mxu0
    %v951 = vadd.f32 %v901, %v950
    %v952 = vpop.f32.mrf.mxu0
    %953 = vdwg.mxu0
    %v954 = vlaneseq
    %v955 = vshrl.u32 %v954, 7
    %v956 = vsub.s32 0, %v955
    %v957 = vrot.slane %v92, %v956
    %v958 = vadd.f32 %v948, %v957
    %v959 = vadd.f32 %v951, %v957
    %v960 = vadd.f32 %v89, %v958
    %v961 = vadd.f32 %v90, %v959
    %v962 = vsel %vm121, %v960, 0.0
    %963 = vadd.xlane.f32.xlu0 %v962
    %v964 = vpop.xlane.xlu0 %963
    %v965 = vsel %vm121, %v961, 0.0
    %966 = vadd.xlane.f32.xlu0 %v965
    %v967 = vpop.xlane.xlu0 %966
    %v968 = vrcp.pop 32.0
    %v969 = vmul.f32 %v964, %v968
    %v970 = vmul.f32 %v967, %v968
    %v971 = vsub.f32 %v960, %v969
    %v972 = vsub.f32 %v961, %v970
    %v973 = vmul.f32 %v971, %v971
    %v974 = vmul.f32 %v972, %v972
    %v975 = vsel %vm121, %v973, 0.0
    %976 = vadd.xlane.f32.xlu0 %v975
    %v977 = vpop.xlane.xlu0 %976
    %v978 = vsel %vm121, %v974, 0.0
    %979 = vadd.xlane.f32.xlu0 %v978
    %v980 = vpop.xlane.xlu0 %979
    %v981 = vmul.f32 %v977, %v968
    %v982 = vmul.f32 %v980, %v968
    %v983 = vadd.f32 %v981, 1e-05
    %v984 = vadd.f32 %v982, 1e-05
    %v985 = vrsqrt.pop %v983
    %v986 = vrsqrt.pop %v984
    %v987 = vmul.f32 %v971, %v985
    %v988 = vmul.f32 %v972, %v986
    %v989 = vlaneseq
    %v990 = vshrl.u32 %v989, 7
    %v991 = vsub.s32 0, %v990
    %v992 = vrot.slane %v95, %v991
    %v993 = vmul.f32 %v987, %v992
    %v994 = vmul.f32 %v988, %v992
    %v995 = vlaneseq
    %v996 = vshrl.u32 %v995, 7
    %v997 = vsub.s32 0, %v996
    %v998 = vrot.slane %v96, %v997
    %v999 = vadd.f32 %v993, %v998
    %v1000 = vadd.f32 %v994, %v998
    %v1001 = vpack.c.bf16 %v1000, %v999
    %v1002 = vld [vmem:[#allocation5] sm:$0xf]
    %v1003 = vld [vmem:[#allocation5 + $0x4] sm:$0xf]
    %v1004 = vld [vmem:[#allocation5 + $0x8] sm:$0xf]
    %v1005 = vld [vmem:[#allocation5 + $0xc] sm:$0xf]
    %v1006 = vlaneseq
    %v1007 = vshrl.u32 %v1006, 7
    %v1008 = vsub.s32 0, %v1007
    %v1009 = vrot.slane %v93, %v1008
    %v1014 = vunpack.c.l.b16 %v1002
    %v1015 = vunpack.c.l.b16 %v1003
    %v1016 = vunpack.c.l.b16 %v1004
    %v1017 = vunpack.c.l.b16 %v1005
    %v1018 = vpack.c.b16 %v1015, %v1014
    %v1019 = vpack.c.b16 %v1017, %v1016
    %v1023 = vsel %vm121, %v1001, 0
    %1025 = vmatprep.subr.bf16.mxu0 0
    %1026 = vmatpush1.bf16.msra.mxu0 0
    %1027 = vmatprep.subr.bf16.mxu0 0
    %1028 = vmatpush1.bf16.msra.mxu0 0
    %1029 = vmatprep.subr.bf16.mxu0 0
    %1030 = vmatpush1.bf16.msra.mxu0 0
    %1031 = vmatprep.subr.bf16.mxu0 0
    %1032 = vmatpush1.bf16.msra.mxu0 0
    %1033 = vmatprep.subr.bf16.mxu0 0
    %1034 = vmatpush1.bf16.msra.mxu0 0
    %1035 = vmatprep.subr.bf16.mxu0 0
    %1036 = vmatpush1.bf16.msra.mxu0 0
    %1037 = vmatprep.subr.bf16.mxu0 0
    %1038 = vmatpush1.bf16.msra.mxu0 %v1019
    %1039 = vmatprep.subr.bf16.mxu0 0
    %1040 = vmatpush1.bf16.msra.mxu0 %v1018
    %1041 = vmatprep.subr.bf16.mxu0 0
    %1042 = vmatpush2.bf16.msra.mxu0 0
    %1043 = vmatprep.subr.bf16.mxu0 0
    %1044 = vmatpush2.bf16.msra.mxu0 0
    %1045 = vmatprep.subr.bf16.mxu0 0
    %1046 = vmatpush2.bf16.msra.mxu0 0
    %1047 = vmatprep.subr.bf16.mxu0 0
    %1048 = vmatpush2.bf16.msra.mxu0 0
    %1049 = vmatprep.subr.bf16.mxu0 0
    %1050 = vmatpush2.bf16.msra.mxu0 0
    %1051 = vmatprep.subr.bf16.mxu0 0
    %1052 = vmatpush2.bf16.msra.mxu0 0
    %1053 = vmatprep.subr.bf16.mxu0 0
    %1054 = vmatpush2.bf16.msra.mxu0 0
    %1055 = vmatprep.subr.bf16.mxu0 0
    %1056 = vmatpush2.bf16.msra.mxu0 0
    %1057 = vmatprep.mubr.bf16.mxu0 0
    %1058 = vmatmul.mubr.bf16.gmra.mxu0 %v1023
    %v1059 = vpop.f32.mrf.mxu0
    %v1060 = vadd.f32 %v1009, %v1059
    %v1061 = vpop.f32.mrf.mxu0
    %v1062 = vpop.f32.mrf.mxu0
    %v1063 = vadd.f32 %v1009, %v1062
    %v1064 = vpop.f32.mrf.mxu0
    %1065 = vdwg.mxu0
    %v1066 = vmax.f32 %v1060, 0.0
    %v1067 = vmax.f32 %v1063, 0.0
    %v1068 = vpack.c.bf16 %v1067, %v1066
    %v1069 = vld [vmem:[%s6] sm:$0xf]
    %v1070 = vld [vmem:[%s6 + $0x4] sm:$0xf]
    %v1071 = vld [vmem:[%s6 + $0x8] sm:$0xf]
    %v1072 = vld [vmem:[%s6 + $0xc] sm:$0xf]
    %v1073 = vld [vmem:[%s6 + $0x10] sm:$0xf]
    %v1074 = vld [vmem:[%s6 + $0x14] sm:$0xf]
    %v1075 = vld [vmem:[%s6 + $0x18] sm:$0xf]
    %v1076 = vld [vmem:[%s6 + $0x1c] sm:$0xf]
    %v1077 = vlaneseq
    %v1078 = vshrl.u32 %v1077, 7
    %v1079 = vsub.s32 0, %v1078
    %v1080 = vrot.slane %v94, %v1079
    %v1089 = vunpack.c.l.b16 %v1069
    %v1090 = vunpack.c.l.b16 %v1070
    %v1091 = vunpack.c.l.b16 %v1071
    %v1092 = vunpack.c.l.b16 %v1072
    %v1093 = vunpack.c.l.b16 %v1073
    %v1094 = vunpack.c.l.b16 %v1074
    %v1095 = vunpack.c.l.b16 %v1075
    %v1096 = vunpack.c.l.b16 %v1076
    %v1097 = vpack.c.b16 %v1090, %v1089
    %v1098 = vpack.c.b16 %v1092, %v1091
    %v1099 = vpack.c.b16 %v1094, %v1093
    %v1100 = vpack.c.b16 %v1096, %v1095
    %vm1105 = vcmask 523264
    %v1107 = vsel %vm1105, %v1068, 0
    %1109 = vmatprep.subr.bf16.mxu0 0
    %1110 = vmatpush1.bf16.msra.mxu0 0
    %1111 = vmatprep.subr.bf16.mxu0 0
    %1112 = vmatpush1.bf16.msra.mxu0 0
    %1113 = vmatprep.subr.bf16.mxu0 0
    %1114 = vmatpush1.bf16.msra.mxu0 0
    %1115 = vmatprep.subr.bf16.mxu0 0
    %1116 = vmatpush1.bf16.msra.mxu0 0
    %1117 = vmatprep.subr.bf16.mxu0 0
    %1118 = vmatpush1.bf16.msra.mxu0 %v1100
    %1119 = vmatprep.subr.bf16.mxu0 0
    %1120 = vmatpush1.bf16.msra.mxu0 %v1099
    %1121 = vmatprep.subr.bf16.mxu0 0
    %1122 = vmatpush1.bf16.msra.mxu0 %v1098
    %1123 = vmatprep.subr.bf16.mxu0 0
    %1124 = vmatpush1.bf16.msra.mxu0 %v1097
    %1125 = vmatprep.subr.bf16.mxu0 0
    %1126 = vmatpush2.bf16.msra.mxu0 0
    %1127 = vmatprep.subr.bf16.mxu0 0
    %1128 = vmatpush2.bf16.msra.mxu0 0
    %1129 = vmatprep.subr.bf16.mxu0 0
    %1130 = vmatpush2.bf16.msra.mxu0 0
    %1131 = vmatprep.subr.bf16.mxu0 0
    %1132 = vmatpush2.bf16.msra.mxu0 0
    %1133 = vmatprep.subr.bf16.mxu0 0
    %1134 = vmatpush2.bf16.msra.mxu0 0
    %1135 = vmatprep.subr.bf16.mxu0 0
    %1136 = vmatpush2.bf16.msra.mxu0 0
    %1137 = vmatprep.subr.bf16.mxu0 0
    %1138 = vmatpush2.bf16.msra.mxu0 0
    %1139 = vmatprep.subr.bf16.mxu0 0
    %1140 = vmatpush2.bf16.msra.mxu0 0
    %1141 = vmatprep.mubr.bf16.mxu0 0
    %1142 = vmatmul.mubr.bf16.gmra.mxu0 %v1107
    %v1143 = vpop.f32.mrf.mxu0
    %v1144 = vadd.f32 %v1080, %v1143
    %v1145 = vpop.f32.mrf.mxu0
    %v1146 = vpop.f32.mrf.mxu0
    %v1147 = vadd.f32 %v1080, %v1146
    %v1148 = vpop.f32.mrf.mxu0
    %1149 = vdwg.mxu0
    %v1150 = vadd.f32 %v999, %v1144
    %v1151 = vadd.f32 %v1000, %v1147
    %v1152 = vsel %vm121, %v1150, 0.0
    %1153 = vadd.xlane.f32.xlu0 %v1152
    %v1154 = vpop.xlane.xlu0 %1153
    %v1155 = vsel %vm121, %v1151, 0.0
    %1156 = vadd.xlane.f32.xlu0 %v1155
    %v1157 = vpop.xlane.xlu0 %1156
    %v1158 = vmul.f32 %v1154, %v968
    %v1159 = vmul.f32 %v1157, %v968
    %v1160 = vsub.f32 %v1150, %v1158
    %v1161 = vsub.f32 %v1151, %v1159
    %v1162 = vmul.f32 %v1160, %v1160
    %v1163 = vmul.f32 %v1161, %v1161
    %v1164 = vsel %vm121, %v1162, 0.0
    %1165 = vadd.xlane.f32.xlu0 %v1164
    %v1166 = vpop.xlane.xlu0 %1165
    %v1167 = vsel %vm121, %v1163, 0.0
    %1168 = vadd.xlane.f32.xlu0 %v1167
    %v1169 = vpop.xlane.xlu0 %1168
    %v1170 = vmul.f32 %v1166, %v968
    %v1171 = vmul.f32 %v1169, %v968
    %v1172 = vadd.f32 %v1170, 1e-05
    %v1173 = vadd.f32 %v1171, 1e-05
    %v1174 = vrsqrt.pop %v1172
    %v1175 = vrsqrt.pop %v1173
    %v1176 = vmul.f32 %v1160, %v1174
    %v1177 = vmul.f32 %v1161, %v1175
    %v1178 = vlaneseq
    %v1179 = vshrl.u32 %v1178, 7
    %v1180 = vsub.s32 0, %v1179
    %v1181 = vrot.slane %v97, %v1180
    %v1182 = vmul.f32 %v1176, %v1181
    %v1183 = vmul.f32 %v1177, %v1181
    %v1184 = vlaneseq
    %v1185 = vshrl.u32 %v1184, 7
    %v1186 = vsub.s32 0, %v1185
    %v1187 = vrot.slane %v98, %v1186
    %v1188 = vadd.f32 %v1182, %v1187
    %v1189 = vadd.f32 %v1183, %v1187
    %v1190 = vld [vmem:[%s2] sm:$0x3]
    %v1192 = vsel %vm171, %v1190, 0
    %1194 = vmatprep.subr.mxu0 0.0
    %1195 = vmatpush1.msra.mxu0 0.0
    %1196 = vmatprep.subr.mxu0 0.0
    %1197 = vmatpush1.msra.mxu0 0.0
    %1198 = vmatprep.subr.mxu0 0.0
    %1199 = vmatpush1.msra.mxu0 0.0
    %1200 = vmatprep.subr.mxu0 0.0
    %1201 = vmatpush1.msra.mxu0 0.0
    %1202 = vmatprep.subr.mxu0 0.0
    %1203 = vmatpush1.msra.mxu0 0.0
    %1204 = vmatprep.subr.mxu0 0.0
    %1205 = vmatpush1.msra.mxu0 0.0
    %1206 = vmatprep.subr.mxu0 0.0
    %1207 = vmatpush1.msra.mxu0 0.0
    %1208 = vmatprep.subr.mxu0 0.0
    %1209 = vmatpush1.msra.mxu0 0.0
    %1210 = vmatprep.subr.mxu0 0.0
    %1211 = vmatpush1.msra.mxu0 0.0
    %1212 = vmatprep.subr.mxu0 0.0
    %1213 = vmatpush1.msra.mxu0 0.0
    %1214 = vmatprep.subr.mxu0 0.0
    %1215 = vmatpush1.msra.mxu0 0.0
    %1216 = vmatprep.subr.mxu0 0.0
    %1217 = vmatpush1.msra.mxu0 0.0
    %1218 = vmatprep.subr.mxu0 0.0
    %1219 = vmatpush1.msra.mxu0 0.0
    %1220 = vmatprep.subr.mxu0 0.0
    %1221 = vmatpush1.msra.mxu0 0.0
    %1222 = vmatprep.subr.mxu0 0.0
    %1223 = vmatpush1.msra.mxu0 %v1189
    %1224 = vmatprep.subr.mxu0 0.0
    %1225 = vmatpush1.msra.mxu0 %v1188
    %1226 = vmatprep.subr.mxu0 0.0
    %1227 = vmatpush2.msra.mxu0 0.0
    %1228 = vmatprep.subr.mxu0 0.0
    %1229 = vmatpush2.msra.mxu0 0.0
    %1230 = vmatprep.subr.mxu0 0.0
    %1231 = vmatpush2.msra.mxu0 0.0
    %1232 = vmatprep.subr.mxu0 0.0
    %1233 = vmatpush2.msra.mxu0 0.0
    %1234 = vmatprep.subr.mxu0 0.0
    %1235 = vmatpush2.msra.mxu0 0.0
    %1236 = vmatprep.subr.mxu0 0.0
    %1237 = vmatpush2.msra.mxu0 0.0
    %1238 = vmatprep.subr.mxu0 0.0
    %1239 = vmatpush2.msra.mxu0 0.0
    %1240 = vmatprep.subr.mxu0 0.0
    %1241 = vmatpush2.msra.mxu0 0.0
    %1242 = vmatprep.subr.mxu0 0.0
    %1243 = vmatpush2.msra.mxu0 0.0
    %1244 = vmatprep.subr.mxu0 0.0
    %1245 = vmatpush2.msra.mxu0 0.0
    %1246 = vmatprep.subr.mxu0 0.0
    %1247 = vmatpush2.msra.mxu0 0.0
    %1248 = vmatprep.subr.mxu0 0.0
    %1249 = vmatpush2.msra.mxu0 0.0
    %1250 = vmatprep.subr.mxu0 0.0
    %1251 = vmatpush2.msra.mxu0 0.0
    %1252 = vmatprep.subr.mxu0 0.0
    %1253 = vmatpush2.msra.mxu0 0.0
    %1254 = vmatprep.subr.mxu0 0.0
    %1255 = vmatpush2.msra.mxu0 0.0
    %1256 = vmatprep.subr.mxu0 0.0
    %1257 = vmatpush2.msra.mxu0 0.0
    %1258 = vmatprep.mubr.f32.mxu0 0.0
    %1259 = vmatmul.mubr.f32.gmra.mxu0 %v1192
    %v1260 = vpop.f32.mrf.mxu0
    %v1261 = vadd.f32 0.0, %v1260
    %v1262 = vpop.f32.mrf.mxu0
    %1263 = vdwg.mxu0
    %v1264 = vpack.c.bf16 %v1261, %v1261
    %v1265 = vld [vmem:[#allocation7] sm:$0xf]
    %v1266 = vld [vmem:[#allocation7 + $0x4] sm:$0xf]
    %v1267 = vld [vmem:[#allocation7 + $0x8] sm:$0xf]
    %v1268 = vld [vmem:[#allocation7 + $0xc] sm:$0xf]
    %v1269 = vlaneseq
    %v1270 = vshrl.u32 %v1269, 7
    %v1271 = vsub.s32 0, %v1270
    %v1272 = vrot.slane %v99, %v1271
    %v1277 = vunpack.c.l.b16 %v1265
    %v1278 = vunpack.c.l.b16 %v1266
    %v1279 = vunpack.c.l.b16 %v1267
    %v1280 = vunpack.c.l.b16 %v1268
    %v1281 = vpack.c.b16 %v1278, %v1277
    %v1282 = vpack.c.b16 %v1280, %v1279
    %v1286 = vsel %vm121, %v1264, 0
    %1288 = vmatprep.subr.bf16.mxu0 0
    %1289 = vmatpush1.bf16.msra.mxu0 0
    %1290 = vmatprep.subr.bf16.mxu0 0
    %1291 = vmatpush1.bf16.msra.mxu0 0
    %1292 = vmatprep.subr.bf16.mxu0 0
    %1293 = vmatpush1.bf16.msra.mxu0 0
    %1294 = vmatprep.subr.bf16.mxu0 0
    %1295 = vmatpush1.bf16.msra.mxu0 0
    %1296 = vmatprep.subr.bf16.mxu0 0
    %1297 = vmatpush1.bf16.msra.mxu0 0
    %1298 = vmatprep.subr.bf16.mxu0 0
    %1299 = vmatpush1.bf16.msra.mxu0 0
    %1300 = vmatprep.subr.bf16.mxu0 0
    %1301 = vmatpush1.bf16.msra.mxu0 %v1282
    %1302 = vmatprep.subr.bf16.mxu0 0
    %1303 = vmatpush1.bf16.msra.mxu0 %v1281
    %1304 = vmatprep.subr.bf16.mxu0 0
    %1305 = vmatpush2.bf16.msra.mxu0 0
    %1306 = vmatprep.subr.bf16.mxu0 0
    %1307 = vmatpush2.bf16.msra.mxu0 0
    %1308 = vmatprep.subr.bf16.mxu0 0
    %1309 = vmatpush2.bf16.msra.mxu0 0
    %1310 = vmatprep.subr.bf16.mxu0 0
    %1311 = vmatpush2.bf16.msra.mxu0 0
    %1312 = vmatprep.subr.bf16.mxu0 0
    %1313 = vmatpush2.bf16.msra.mxu0 0
    %1314 = vmatprep.subr.bf16.mxu0 0
    %1315 = vmatpush2.bf16.msra.mxu0 0
    %1316 = vmatprep.subr.bf16.mxu0 0
    %1317 = vmatpush2.bf16.msra.mxu0 0
    %1318 = vmatprep.subr.bf16.mxu0 0
    %1319 = vmatpush2.bf16.msra.mxu0 0
    %1320 = vmatprep.mubr.bf16.mxu0 0
    %1321 = vmatmul.mubr.bf16.gmra.mxu0 %v1286
    %v1322 = vpop.f32.mrf.mxu0
    %v1323 = vadd.f32 %v1272, %v1322
    %v1324 = vpop.f32.mrf.mxu0
    %v1325 = vpop.f32.mrf.mxu0
    %v1326 = vpop.f32.mrf.mxu0
    %1327 = vdwg.mxu0
    %1328 = vst [vmem:[#allocation10] sm:$0x3] %v1323
    // Predicated region
    $region54: #{tpu_custom_call.1} parent=1 // pred_check
      _
    $region55: #{tpu_custom_call.1} parent=1 // pred_check_branch
      %1330 = sbr.rel (0) target = $region57
    $region56: #{tpu_custom_call.1} parent=1 // pred_region
      %s1332 = ssub.s32 32, 32
      %1333 = vsyncadd [#allocation4], %s1332
      %s1335 = sshll.u32 [#allocation10], 4
      %s1336 = int_to_ptr.vmem [resolvable:$true] %s1335
      %1338 = dma.vmem_to_hbm [thread:$0]  %s1336, 32, %s9, [#allocation4]
    $region57: #{tpu_custom_call.1} parent=1 // pred_fallthru
      _
    // Predicated region
    $region58: #{tpu_custom_call.1} parent=1 // pred_check
      _
    $region59: #{tpu_custom_call.1} parent=1 // pred_check_branch
      %1340 = sbr.rel (0) target = $region61
    $region60: #{tpu_custom_call.1} parent=1 // pred_region
      %1341 = dma.done [#allocation4], 32
    $region61: #{tpu_custom_call.1} parent=1 // pred_fallthru
      _
    %1342 = vsyncpa [#allocation3], 1
    %1343 = vsyncpa [#allocation6], 1
    %1344 = vsyncpa [#allocation9], 1
    %1345 = vsyncpa [#allocation4], 1

</llo_original>
